<compile_context>
chip_gen: v5e
topology: v5e:2x2
jax: 0.10.0
libtpu: 0.0.40
codegen_flags: <defaults>
</compile_context>

<pallas_src>
import functools

import jax
import jax.numpy as jnp
from jax.experimental import pallas as pl
from jax.experimental.pallas import tpu as pltpu

# ---- module dimensions (from the PyTorch spec) -------------------------------
MODEL_FACTOR = 2
INPUT_LAYER = 28 * 28               # 784 (= 98 * 8, so a legal full-width last dim)
FIRST_LAYER = MODEL_FACTOR * 256    # 512
SECOND_LAYER = MODEL_FACTOR * 128   # 256
THIRD_LAYER = MODEL_FACTOR * 64     # 128
OUTPUT_LAYER = 10

PAD_OUT = 128    # 10 zero-padded to one full lane group for a lane-dense store


def _round_up(n, m):
    return ((n + m - 1) // m) * m


def _choose_tile(batch, block_b):
    """Batch tile policy.

    * batch <= block_b: one grid step owning the whole batch (tile == full batch dim,
      which is always a legal block shape).  No split on single-TC v5e/v6e, and no
      point sharding tiny matmuls across v7x's two TensorCores.
    * batch  > block_b: block_b-row steps (multiple of 8 for f32 sublanes).  With the
      default block_b=512 each v7x TensorCore gets >=256-row shards via the parallel
      grid axis, and the MXU M-dim stays fat on every generation.
    """
    block_b = max(8, _round_up(block_b, 8))
    if batch <= block_b:
        return batch
    return block_b


def _mlp_kernel(x_ref,
                w1_ref, b1_ref,
                w2_ref, b2_ref,
                w3_ref, b3_ref,
                w4_ref, b4_ref,
                o_ref):
    """Whole 4-layer MLP fused in one kernel invocation.

    x_ref: (TB, 784) f32 (cast to bf16 here, not in the wrapper);
    wN: bf16 (in, out); bN: f32 (1, out); o_ref: (TB, 128) bf16.
    All matmuls accumulate in f32 on the MXU; bias/ReLU math is f32, activations are
    recast to bf16 between layers.
    """
    x = x_ref[...].astype(jnp.bfloat16)                       # in-kernel cast (VPU, cheap)

    h = jnp.dot(x, w1_ref[...], preferred_element_type=jnp.float32) + b1_ref[...]
    h = jnp.maximum(h, 0.0).astype(jnp.bfloat16)

    h = jnp.dot(h, w2_ref[...], preferred_element_type=jnp.float32) + b2_ref[...]
    h = jnp.maximum(h, 0.0).astype(jnp.bfloat16)

    h = jnp.dot(h, w3_ref[...], preferred_element_type=jnp.float32) + b3_ref[...]
    h = jnp.maximum(h, 0.0).astype(jnp.bfloat16)

    out = jnp.dot(h, w4_ref[...], preferred_element_type=jnp.float32) + b4_ref[...]
    o_ref[...] = out.astype(o_ref.dtype)                      # (TB, 128) lane-dense store


def pack_params(params):
    """Cast weights to bf16 (biases stay f32) and pad only the last layer's N to 128.

    Input layout: wN is (in_features, out_features) (transpose of torch), bN is (1, out).
    w1 is left at K=784 — the kernel's x block carries the raw 784 features, so no
    K-padding pass over the activations is required.
    """
    w4 = jnp.pad(params["w4"], ((0, 0), (0, PAD_OUT - OUTPUT_LAYER)))       # (128, 128)
    b4 = jnp.pad(params["b4"], ((0, 0), (0, PAD_OUT - OUTPUT_LAYER)))       # (1, 128)
    return {
        "w1": params["w1"].astype(jnp.bfloat16),   # (784, 512)
        "w2": params["w2"].astype(jnp.bfloat16),   # (512, 256)
        "w3": params["w3"].astype(jnp.bfloat16),   # (256, 128)
        "w4": w4.astype(jnp.bfloat16),             # (128, 128)
        "b1": params["b1"].astype(jnp.float32),
        "b2": params["b2"].astype(jnp.float32),
        "b3": params["b3"].astype(jnp.float32),
        "b4": b4.astype(jnp.float32),
    }


@functools.partial(jax.jit, static_argnames=("block_b",))
def digit_classifier_forward(x, packed, *, block_b=512):
    """Forward pass of DigitClassifier.

    x: (B, 1, 28, 28) float32 (NCHW, like the torch module input)
    packed: output of pack_params() (bf16 weights, f32 biases)
    returns: (B, 10) float32 logits
    """
    B = x.shape[0]
    # nn.Flatten: (B, 1, 28, 28) -> (B, 784).  Stays f32 — the bf16 cast happens inside
    # the kernel, so there is no extra HBM pass over the activations here.
    x2d = x.reshape(B, INPUT_LAYER)

    tile = _choose_tile(B, block_b)
    grid = (pl.cdiv(B, tile),)   # partial last block (if any) is masked by Pallas;
                                 # no wrapper-side batch padding copy.

    # Weights/biases are replicated (index_map always returns block (0, 0)), so Pallas
    # fetches them once and keeps them resident across grid steps (~1.25 MB bf16).
    def rep(shape):
        return pl.BlockSpec(shape, lambda i: (0, 0))

    rows = grid[0] * tile
    flops = 2 * rows * (INPUT_LAYER * FIRST_LAYER
                        + FIRST_LAYER * SECOND_LAYER
                        + SECOND_LAYER * THIRD_LAYER
                        + THIRD_LAYER * PAD_OUT)
    weight_elems = (INPUT_LAYER * FIRST_LAYER + FIRST_LAYER * SECOND_LAYER
                    + SECOND_LAYER * THIRD_LAYER + THIRD_LAYER * PAD_OUT)
    bias_elems = FIRST_LAYER + SECOND_LAYER + THIRD_LAYER + PAD_OUT
    bytes_accessed = (B * INPUT_LAYER * 4            # f32 activations in
                      + weight_elems * 2             # bf16 weights
                      + bias_elems * 4               # f32 biases
                      + B * PAD_OUT * 2)             # bf16 logits out
    cost = pl.CostEstimate(flops=flops, transcendentals=0,
                           bytes_accessed=bytes_accessed)

    out = pl.pallas_call(
        _mlp_kernel,
        out_shape=jax.ShapeDtypeStruct((B, PAD_OUT), jnp.bfloat16),
        grid_spec=pltpu.PrefetchScalarGridSpec(
            num_scalar_prefetch=0,
            grid=grid,
            in_specs=[
                pl.BlockSpec((tile, INPUT_LAYER), lambda i: (i, 0)),   # x tile (f32)
                rep((INPUT_LAYER, FIRST_LAYER)),   rep((1, FIRST_LAYER)),
                rep((FIRST_LAYER, SECOND_LAYER)),  rep((1, SECOND_LAYER)),
                rep((SECOND_LAYER, THIRD_LAYER)),  rep((1, THIRD_LAYER)),
                rep((THIRD_LAYER, PAD_OUT)),       rep((1, PAD_OUT)),
            ],
            out_specs=pl.BlockSpec((tile, PAD_OUT), lambda i: (i, 0)),
        ),
        compiler_params=pltpu.CompilerParams(
            dimension_semantics=("parallel",),
        ),
        cost_estimate=cost,
    )(
        x2d,
        packed["w1"], packed["b1"],
        packed["w2"], packed["b2"],
        packed["w3"], packed["b3"],
        packed["w4"], packed["b4"],
    )
    # Slice off the 118 zero-padded logit columns; tiny (B, 10) cast back to f32.
    return out[:, :OUTPUT_LAYER].astype(jnp.float32)


def init_params(key):
    """Deterministic init mimicking torch.nn.Linear default (U[-1/sqrt(fan_in), +1/sqrt(fan_in)]).

    Weights are stored as (in_features, out_features) — the transpose of torch's
    (out, in) layout — so the kernel computes x @ W + b.
    """
    dims = [INPUT_LAYER, FIRST_LAYER, SECOND_LAYER, THIRD_LAYER, OUTPUT_LAYER]
    params = {}
    keys = jax.random.split(key, 2 * (len(dims) - 1))
    for n, (fan_in, fan_out) in enumerate(zip(dims[:-1], dims[1:]), start=1):
        bound = 1.0 / jnp.sqrt(jnp.float32(fan_in))
        wk, bk = keys[2 * (n - 1)], keys[2 * (n - 1) + 1]
        params[f"w{n}"] = jax.random.uniform(
            wk, (fan_in, fan_out), jnp.float32, minval=-bound, maxval=bound)
        params[f"b{n}"] = jax.random.uniform(
            bk, (1, fan_out), jnp.float32, minval=-bound, maxval=bound)
    return params


def _reference_forward_bf16(x, packed):
    """Pure-JAX reference using the same bf16 packed params / casts as the kernel."""
    h = x.reshape(x.shape[0], -1).astype(jnp.bfloat16)
    h = jnp.maximum(jnp.dot(h, packed["w1"], preferred_element_type=jnp.float32)
                    + packed["b1"], 0.0).astype(jnp.bfloat16)
    h = jnp.maximum(jnp.dot(h, packed["w2"], preferred_element_type=jnp.float32)
                    + packed["b2"], 0.0).astype(jnp.bfloat16)
    h = jnp.maximum(jnp.dot(h, packed["w3"], preferred_element_type=jnp.float32)
                    + packed["b3"], 0.0).astype(jnp.bfloat16)
    out = jnp.dot(h, packed["w4"], preferred_element_type=jnp.float32) + packed["b4"]
    return out.astype(jnp.bfloat16)[:, :OUTPUT_LAYER].astype(jnp.float32)


def _reference_forward_f32(x, params):
    """Full-precision reference of the torch module (semantic sanity check)."""
    h = x.reshape(x.shape[0], -1).astype(jnp.float32)
    h = jnp.maximum(h @ params["w1"] + params["b1"], 0.0)
    h = jnp.maximum(h @ params["w2"] + params["b2"], 0.0)
    h = jnp.maximum(h @ params["w3"] + params["b3"], 0.0)
    return h @ params["w4"] + params["b4"]


if __name__ == "__main__":
    key = jax.random.PRNGKey(0)
    pkey, xkey = jax.random.split(key)

    params = init_params(pkey)
    packed = pack_params(params)

    # Small MNIST-style batch: (B, C, H, W) = (2, 1, 28, 28)
    x = jax.random.normal(xkey, (2, 1, 28, 28), jnp.float32)

    logits = digit_classifier_forward(x, packed)
    logits = jax.block_until_ready(logits)
    assert logits.shape == (2, OUTPUT_LAYER)

    # Exact-math reference (same bf16 quantization as the kernel).
    ref_bf16 = _reference_forward_bf16(x, packed)
    assert jnp.allclose(logits, ref_bf16, atol=2e-2, rtol=2e-2), \
        float(jnp.max(jnp.abs(logits - ref_bf16)))

    # Loose semantic check against the full-f32 torch-equivalent forward.
    ref_f32 = _reference_forward_f32(x, params)
    assert jnp.allclose(logits, ref_f32, atol=1e-1, rtol=1e-1), \
        float(jnp.max(jnp.abs(logits - ref_f32)))

    print("KERNEL_OK")
</pallas_src>

<mosaic_0001>
module attributes {stable_mosaic.version = 11 : i64} {
  func.func @_mlp_kernel(%arg0: i32, %arg1: memref<2x784xf32, #tpu.memory_space<vmem>>, %arg2: memref<784x512xbf16, #tpu.memory_space<vmem>>, %arg3: memref<1x512xf32, #tpu.memory_space<vmem>>, %arg4: memref<512x256xbf16, #tpu.memory_space<vmem>>, %arg5: memref<1x256xf32, #tpu.memory_space<vmem>>, %arg6: memref<256x128xbf16, #tpu.memory_space<vmem>>, %arg7: memref<1x128xf32, #tpu.memory_space<vmem>>, %arg8: memref<128x128xbf16, #tpu.memory_space<vmem>>, %arg9: memref<1x128xf32, #tpu.memory_space<vmem>>, %arg10: memref<2x128xbf16, #tpu.memory_space<vmem>>) attributes {dimension_semantics = [#tpu.dimension_semantics<parallel>], iteration_bounds = array<i64: 1>, scalar_prefetch = 0 : i64, scratch_operands = 0 : i64, tpu.core_type = #tpu.core_type<tc>, window_params = [{transform_indices = @transform_0, window_bounds = array<i64: 2, 784>}, {pipeline_mode = #tpu.pipeline_mode<synchronous>, transform_indices = @transform_1, window_bounds = array<i64: 784, 512>}, {pipeline_mode = #tpu.pipeline_mode<synchronous>, transform_indices = @transform_2, window_bounds = array<i64: 1, 512>}, {pipeline_mode = #tpu.pipeline_mode<synchronous>, transform_indices = @transform_3, window_bounds = array<i64: 512, 256>}, {pipeline_mode = #tpu.pipeline_mode<synchronous>, transform_indices = @transform_4, window_bounds = array<i64: 1, 256>}, {pipeline_mode = #tpu.pipeline_mode<synchronous>, transform_indices = @transform_5, window_bounds = array<i64: 256, 128>}, {pipeline_mode = #tpu.pipeline_mode<synchronous>, transform_indices = @transform_6, window_bounds = array<i64: 1, 128>}, {pipeline_mode = #tpu.pipeline_mode<synchronous>, transform_indices = @transform_7, window_bounds = array<i64: 128, 128>}, {pipeline_mode = #tpu.pipeline_mode<synchronous>, transform_indices = @transform_8, window_bounds = array<i64: 1, 128>}, {transform_indices = @transform_9, window_bounds = array<i64: 2, 128>}]} {
    %c0 = arith.constant 0 : index
    %c0_0 = arith.constant 0 : index
    %0 = vector.load %arg1[%c0, %c0_0] : memref<2x784xf32, #tpu.memory_space<vmem>>, vector<2x784xf32>
    %1 = arith.truncf %0 : vector<2x784xf32> to vector<2x784xbf16>
    %c0_1 = arith.constant 0 : index
    %c0_2 = arith.constant 0 : index
    %2 = vector.load %arg2[%c0_1, %c0_2] : memref<784x512xbf16, #tpu.memory_space<vmem>>, vector<784x512xbf16>
    %cst = arith.constant dense<0.000000e+00> : vector<2x512xf32>
    %3 = tpu.matmul %1, %2, %cst {dimension_numbers = #tpu.dot_dimension_numbers<[1], [0], [0], [1], [0, 0, 1, 1], [], []>} : vector<2x784xbf16>, vector<784x512xbf16>, vector<2x512xf32> -> vector<2x512xf32>
    %c0_3 = arith.constant 0 : index
    %c0_4 = arith.constant 0 : index
    %4 = vector.load %arg3[%c0_3, %c0_4] : memref<1x512xf32, #tpu.memory_space<vmem>>, vector<1x512xf32>
    %5 = vector.broadcast %4 : vector<1x512xf32> to vector<2x512xf32>
    %6 = arith.addf %3, %5 : vector<2x512xf32>
    %cst_5 = arith.constant 0.000000e+00 : f32
    %7 = vector.broadcast %cst_5 : f32 to vector<2x512xf32>
    %8 = arith.maximumf %6, %7 : vector<2x512xf32>
    %9 = arith.truncf %8 : vector<2x512xf32> to vector<2x512xbf16>
    %c0_6 = arith.constant 0 : index
    %c0_7 = arith.constant 0 : index
    %10 = vector.load %arg4[%c0_6, %c0_7] : memref<512x256xbf16, #tpu.memory_space<vmem>>, vector<512x256xbf16>
    %cst_8 = arith.constant dense<0.000000e+00> : vector<2x256xf32>
    %11 = tpu.matmul %9, %10, %cst_8 {dimension_numbers = #tpu.dot_dimension_numbers<[1], [0], [0], [1], [0, 0, 1, 1], [], []>} : vector<2x512xbf16>, vector<512x256xbf16>, vector<2x256xf32> -> vector<2x256xf32>
    %c0_9 = arith.constant 0 : index
    %c0_10 = arith.constant 0 : index
    %12 = vector.load %arg5[%c0_9, %c0_10] : memref<1x256xf32, #tpu.memory_space<vmem>>, vector<1x256xf32>
    %13 = vector.broadcast %12 : vector<1x256xf32> to vector<2x256xf32>
    %14 = arith.addf %11, %13 : vector<2x256xf32>
    %cst_11 = arith.constant 0.000000e+00 : f32
    %15 = vector.broadcast %cst_11 : f32 to vector<2x256xf32>
    %16 = arith.maximumf %14, %15 : vector<2x256xf32>
    %17 = arith.truncf %16 : vector<2x256xf32> to vector<2x256xbf16>
    %c0_12 = arith.constant 0 : index
    %c0_13 = arith.constant 0 : index
    %18 = vector.load %arg6[%c0_12, %c0_13] : memref<256x128xbf16, #tpu.memory_space<vmem>>, vector<256x128xbf16>
    %cst_14 = arith.constant dense<0.000000e+00> : vector<2x128xf32>
    %19 = tpu.matmul %17, %18, %cst_14 {dimension_numbers = #tpu.dot_dimension_numbers<[1], [0], [0], [1], [0, 0, 1, 1], [], []>} : vector<2x256xbf16>, vector<256x128xbf16>, vector<2x128xf32> -> vector<2x128xf32>
    %c0_15 = arith.constant 0 : index
    %c0_16 = arith.constant 0 : index
    %20 = vector.load %arg7[%c0_15, %c0_16] : memref<1x128xf32, #tpu.memory_space<vmem>>, vector<1x128xf32>
    %21 = vector.broadcast %20 : vector<1x128xf32> to vector<2x128xf32>
    %22 = arith.addf %19, %21 : vector<2x128xf32>
    %cst_17 = arith.constant 0.000000e+00 : f32
    %23 = vector.broadcast %cst_17 : f32 to vector<2x128xf32>
    %24 = arith.maximumf %22, %23 : vector<2x128xf32>
    %25 = arith.truncf %24 : vector<2x128xf32> to vector<2x128xbf16>
    %c0_18 = arith.constant 0 : index
    %c0_19 = arith.constant 0 : index
    %26 = vector.load %arg8[%c0_18, %c0_19] : memref<128x128xbf16, #tpu.memory_space<vmem>>, vector<128x128xbf16>
    %cst_20 = arith.constant dense<0.000000e+00> : vector<2x128xf32>
    %27 = tpu.matmul %25, %26, %cst_20 {dimension_numbers = #tpu.dot_dimension_numbers<[1], [0], [0], [1], [0, 0, 1, 1], [], []>} : vector<2x128xbf16>, vector<128x128xbf16>, vector<2x128xf32> -> vector<2x128xf32>
    %c0_21 = arith.constant 0 : index
    %c0_22 = arith.constant 0 : index
    %28 = vector.load %arg9[%c0_21, %c0_22] : memref<1x128xf32, #tpu.memory_space<vmem>>, vector<1x128xf32>
    %29 = vector.broadcast %28 : vector<1x128xf32> to vector<2x128xf32>
    %30 = arith.addf %27, %29 : vector<2x128xf32>
    %31 = arith.truncf %30 : vector<2x128xf32> to vector<2x128xbf16>
    %c0_23 = arith.constant 0 : index
    %c0_24 = arith.constant 0 : index
    %32 = vector.load %arg10[%c0_23, %c0_24] : memref<2x128xbf16, #tpu.memory_space<vmem>>, vector<2x128xbf16>
    tpu.vector_store %arg10[%c0_23, %c0_24], %31 {strides = array<i32>} : memref<2x128xbf16, #tpu.memory_space<vmem>>, vector<2x128xbf16>,
    return
  }
  func.func @transform_0(%arg0: i32) -> (i32, i32) {
    %c0_i32 = arith.constant 0 : i32
    %c0_i32_0 = arith.constant 0 : i32
    return %arg0, %c0_i32 : i32, i32
  }
  func.func @transform_1(%arg0: i32) -> (i32, i32) {
    %c0_i32 = arith.constant 0 : i32
    %c0_i32_0 = arith.constant 0 : i32
    %c0_i32_1 = arith.constant 0 : i32
    return %c0_i32, %c0_i32_0 : i32, i32
  }
  func.func @transform_2(%arg0: i32) -> (i32, i32) {
    %c0_i32 = arith.constant 0 : i32
    %c0_i32_0 = arith.constant 0 : i32
    %c0_i32_1 = arith.constant 0 : i32
    return %c0_i32, %c0_i32_0 : i32, i32
  }
  func.func @transform_3(%arg0: i32) -> (i32, i32) {
    %c0_i32 = arith.constant 0 : i32
    %c0_i32_0 = arith.constant 0 : i32
    %c0_i32_1 = arith.constant 0 : i32
    return %c0_i32, %c0_i32_0 : i32, i32
  }
  func.func @transform_4(%arg0: i32) -> (i32, i32) {
    %c0_i32 = arith.constant 0 : i32
    %c0_i32_0 = arith.constant 0 : i32
    %c0_i32_1 = arith.constant 0 : i32
    return %c0_i32, %c0_i32_0 : i32, i32
  }
  func.func @transform_5(%arg0: i32) -> (i32, i32) {
    %c0_i32 = arith.constant 0 : i32
    %c0_i32_0 = arith.constant 0 : i32
    %c0_i32_1 = arith.constant 0 : i32
    return %c0_i32, %c0_i32_0 : i32, i32
  }
  func.func @transform_6(%arg0: i32) -> (i32, i32) {
    %c0_i32 = arith.constant 0 : i32
    %c0_i32_0 = arith.constant 0 : i32
    %c0_i32_1 = arith.constant 0 : i32
    return %c0_i32, %c0_i32_0 : i32, i32
  }
  func.func @transform_7(%arg0: i32) -> (i32, i32) {
    %c0_i32 = arith.constant 0 : i32
    %c0_i32_0 = arith.constant 0 : i32
    %c0_i32_1 = arith.constant 0 : i32
    return %c0_i32, %c0_i32_0 : i32, i32
  }
  func.func @transform_8(%arg0: i32) -> (i32, i32) {
    %c0_i32 = arith.constant 0 : i32
    %c0_i32_0 = arith.constant 0 : i32
    %c0_i32_1 = arith.constant 0 : i32
    return %c0_i32, %c0_i32_0 : i32, i32
  }
  func.func @transform_9(%arg0: i32) -> (i32, i32) {
    %c0_i32 = arith.constant 0 : i32
    %c0_i32_0 = arith.constant 0 : i32
    return %arg0, %c0_i32 : i32, i32
  }
}

</mosaic_0001>

<llo_original>
// kernel: digit_classifier_forward.1
$region0: #{digit_classifier_forward.1}
  #allocation0 [shape = 'u32[]', space=smem, size = 0x4, offset = 0x4, fixed_abs, tag = 'smem constant byte address 0x4 - core index']
  #allocation1 [shape = 'u32[72,128]{1,0:T(1,128)}', space=vmem, size = 0x9000, scoped, tag = 'internal scratch']
  %s0 = inlined_call_operand.vmem [shape: f32[2,784], index: 0, kind: input, shape index: {}]
  %s1 = inlined_call_operand.hbm [shape: bf16[784,512], index: 1, kind: input, shape index: {}]
  %s2 = inlined_call_operand.vmem [shape: f32[1,512], index: 2, kind: input, shape index: {}]
  %s3 = inlined_call_operand.hbm [shape: bf16[512,256], index: 3, kind: input, shape index: {}]
  %s4 = inlined_call_operand.vmem [shape: f32[1,256], index: 4, kind: input, shape index: {}]
  %s5 = inlined_call_operand.vmem [shape: bf16[256,128], index: 5, kind: input, shape index: {}]
  %s6 = inlined_call_operand.vmem [shape: f32[1,128], index: 6, kind: input, shape index: {}]
  %s7 = inlined_call_operand.vmem [shape: bf16[128,128], index: 7, kind: input, shape index: {}]
  %s8 = inlined_call_operand.vmem [shape: f32[1,128], index: 8, kind: input, shape index: {}]
  %s9 = inlined_call_operand.vmem [shape: bf16[2,128], index: 9, kind: output, shape index: {}]
  %s10 = sld [smem:[#allocation0]]
  $region54: #{digit_classifier_forward.1} parent=0
    _
  %s12 = ssub.s32 1, %s10
  %s13 = scalar_select 0, %s12, %s10
  $region1: #{digit_classifier_forward.1} parent=0
    #allocation2 [shape = 'u8[802816]{0}', space=vmem, size = 0xc4000, scoped, tag = 'input window, operand 1, single buffered']
    #allocation3 [shape = 's32[1]{0}', space=sflag, size = 0x4, scoped, tag = 'scoped memory for digit_classifier_forward.1']
    #allocation4 [shape = 'u8[262144]{0}', space=vmem, size = 0x40000, scoped, tag = 'input window, operand 3, single buffered']
    #allocation5 [shape = 's32[1]{0}', space=sflag, size = 0x4, scoped, tag = 'scoped memory for digit_classifier_forward.1']
    %14 = vsyncpa [#allocation3], 0
    %15 = vsyncpa [#allocation5], 0
    // Predicated region
    $region2: #{digit_classifier_forward.1} parent=1 // pred_check
      _
    $region3: #{digit_classifier_forward.1} parent=1 // pred_check_branch
      %17 = sbr.rel (0) target = $region5
    $region4: #{digit_classifier_forward.1} parent=1 // pred_region
      _
    $region5: #{digit_classifier_forward.1} parent=1 // pred_fallthru
      _
    // Predicated region
    $region6: #{digit_classifier_forward.1} parent=1 // pred_check
      _
    $region7: #{digit_classifier_forward.1} parent=1 // pred_check_branch
      %19 = sbr.rel (0) target = $region9
    $region8: #{digit_classifier_forward.1} parent=1 // pred_region
      %21 = vsyncadd [#allocation3], 0
      %s22 = sshll.u32 %s1, 4
      %s23 = int_to_ptr.hbm [resolvable:$true] %s22
      %s24 = sshll.u32 [#allocation2], 4
      %s25 = int_to_ptr.vmem [resolvable:$true] %s24
      %30 = dma.hbm_to_vmem [thread:$0]  %s23, 25088, %s25, [#allocation3], 256, 256, 16
    $region9: #{digit_classifier_forward.1} parent=1 // pred_fallthru
      _
    // Predicated region
    $region10: #{digit_classifier_forward.1} parent=1 // pred_check
      _
    $region11: #{digit_classifier_forward.1} parent=1 // pred_check_branch
      %32 = sbr.rel (0) target = $region13
    $region12: #{digit_classifier_forward.1} parent=1 // pred_region
      _
    $region13: #{digit_classifier_forward.1} parent=1 // pred_fallthru
      _
    // Predicated region
    $region14: #{digit_classifier_forward.1} parent=1 // pred_check
      _
    $region15: #{digit_classifier_forward.1} parent=1 // pred_check_branch
      %34 = sbr.rel (0) target = $region17
    $region16: #{digit_classifier_forward.1} parent=1 // pred_region
      %36 = vsyncadd [#allocation5], 0
      %s37 = sshll.u32 %s3, 4
      %s38 = int_to_ptr.hbm [resolvable:$true] %s37
      %s39 = sshll.u32 [#allocation4], 4
      %s40 = int_to_ptr.vmem [resolvable:$true] %s39
      %45 = dma.hbm_to_vmem [thread:$0]  %s38, 8192, %s40, [#allocation5], 128, 128, 8
    $region17: #{digit_classifier_forward.1} parent=1 // pred_fallthru
      _
    // Predicated region
    $region18: #{digit_classifier_forward.1} parent=1 // pred_check
      _
    $region19: #{digit_classifier_forward.1} parent=1 // pred_check_branch
      %47 = sbr.rel (0) target = $region21
    $region20: #{digit_classifier_forward.1} parent=1 // pred_region
      _
    $region21: #{digit_classifier_forward.1} parent=1 // pred_fallthru
      _
    // Predicated region
    $region22: #{digit_classifier_forward.1} parent=1 // pred_check
      _
    $region23: #{digit_classifier_forward.1} parent=1 // pred_check_branch
      %49 = sbr.rel (0) target = $region25
    $region24: #{digit_classifier_forward.1} parent=1 // pred_region
      _
    $region25: #{digit_classifier_forward.1} parent=1 // pred_fallthru
      _
    // Predicated region
    $region26: #{digit_classifier_forward.1} parent=1 // pred_check
      _
    $region27: #{digit_classifier_forward.1} parent=1 // pred_check_branch
      %51 = sbr.rel (0) target = $region29
    $region28: #{digit_classifier_forward.1} parent=1 // pred_region
      _
    $region29: #{digit_classifier_forward.1} parent=1 // pred_fallthru
      _
    // Predicated region
    $region30: #{digit_classifier_forward.1} parent=1 // pred_check
      _
    $region31: #{digit_classifier_forward.1} parent=1 // pred_check_branch
      %53 = sbr.rel (0) target = $region33
    $region32: #{digit_classifier_forward.1} parent=1 // pred_region
      _
    $region33: #{digit_classifier_forward.1} parent=1 // pred_fallthru
      _
    // Predicated region
    $region34: #{digit_classifier_forward.1} parent=1 // pred_check
      _
    $region35: #{digit_classifier_forward.1} parent=1 // pred_check_branch
      %55 = sbr.rel (0) target = $region37
    $region36: #{digit_classifier_forward.1} parent=1 // pred_region
      _
    $region37: #{digit_classifier_forward.1} parent=1 // pred_fallthru
      _
    // Predicated region
    $region38: #{digit_classifier_forward.1} parent=1 // pred_check
      _
    $region39: #{digit_classifier_forward.1} parent=1 // pred_check_branch
      %57 = sbr.rel (0) target = $region41
    $region40: #{digit_classifier_forward.1} parent=1 // pred_region
      %59 = dma.done [#allocation3], 25088
    $region41: #{digit_classifier_forward.1} parent=1 // pred_fallthru
      _
    // Predicated region
    $region42: #{digit_classifier_forward.1} parent=1 // pred_check
      _
    $region43: #{digit_classifier_forward.1} parent=1 // pred_check_branch
      %61 = sbr.rel (0) target = $region45
    $region44: #{digit_classifier_forward.1} parent=1 // pred_region
      %63 = dma.done [#allocation5], 8192
    $region45: #{digit_classifier_forward.1} parent=1 // pred_fallthru
      _
    %v65 = vld [vmem:[%s0] sm:$0xff]
    %v66 = vld [vmem:[%s0 + $0x8] sm:$0x3f]
    %69 = vst [vmem:[#allocation1] ss:$4 sm:$0xff] %v65
    %s70 = scalar_lea.vmem [#allocation1], 32
    %71 = vst [vmem:[%s70] ss:$4 sm:$0xff] %v66
    %v72 = vld.sshfl [vmem:[#allocation1] sm:$0xff pattern:$0x73625140]
    %v73 = vld.sshfl [vmem:[#allocation1 + $0x8] sm:$0xff pattern:$0x73625140]
    %v74 = vld.sshfl [vmem:[#allocation1 + $0x10] sm:$0xff pattern:$0x73625140]
    %v75 = vld.sshfl [vmem:[#allocation1 + $0x18] sm:$0xff pattern:$0x73625140]
    %v76 = vld.sshfl [vmem:[#allocation1 + $0x20] sm:$0xff pattern:$0x73625140]
    %v77 = vld.sshfl [vmem:[#allocation1 + $0x28] sm:$0xff pattern:$0x73625140]
    %v78 = vld.sshfl [vmem:[#allocation1 + $0x30] sm:$0xff pattern:$0x73625140]
    %v86 = vpack.c.bf16 %v72, %v72
    %v87 = vpack.c.bf16 %v73, %v73
    %v88 = vpack.c.bf16 %v74, %v74
    %v89 = vpack.c.bf16 %v75, %v75
    %v90 = vpack.c.bf16 %v76, %v76
    %v91 = vpack.c.bf16 %v77, %v77
    %v92 = vpack.c.bf16 %v78, %v78
    %v93 = vld [vmem:[#allocation2] sm:$0xff]
    %v94 = vld [vmem:[#allocation2 + $0x8] sm:$0xff]
    %v95 = vld [vmem:[#allocation2 + $0x10] sm:$0xff]
    %v96 = vld [vmem:[#allocation2 + $0x18] sm:$0xff]
    %v97 = vld [vmem:[#allocation2 + $0x20] sm:$0xff]
    %v98 = vld [vmem:[#allocation2 + $0x28] sm:$0xff]
    %v99 = vld [vmem:[#allocation2 + $0x30] sm:$0xff]
    %v100 = vld [vmem:[#allocation2 + $0x38] sm:$0xff]
    %v101 = vld [vmem:[#allocation2 + $0x40] sm:$0xff]
    %v102 = vld [vmem:[#allocation2 + $0x48] sm:$0xff]
    %v103 = vld [vmem:[#allocation2 + $0x50] sm:$0xff]
    %v104 = vld [vmem:[#allocation2 + $0x58] sm:$0xff]
    %v105 = vld [vmem:[#allocation2 + $0x60] sm:$0xff]
    %v106 = vld [vmem:[#allocation2 + $0x68] sm:$0xff]
    %v107 = vld [vmem:[#allocation2 + $0x70] sm:$0xff]
    %v108 = vld [vmem:[#allocation2 + $0x78] sm:$0xff]
    %v109 = vld [vmem:[#allocation2 + $0x80] sm:$0xff]
    %v110 = vld [vmem:[#allocation2 + $0x88] sm:$0xff]
    %v111 = vld [vmem:[#allocation2 + $0x90] sm:$0xff]
    %v112 = vld [vmem:[#allocation2 + $0x98] sm:$0xff]
    %v113 = vld [vmem:[#allocation2 + $0xa0] sm:$0xff]
    %v114 = vld [vmem:[#allocation2 + $0xa8] sm:$0xff]
    %v115 = vld [vmem:[#allocation2 + $0xb0] sm:$0xff]
    %v116 = vld [vmem:[#allocation2 + $0xb8] sm:$0xff]
    %v117 = vld [vmem:[#allocation2 + $0xc0] sm:$0xff]
    %v118 = vld [vmem:[#allocation2 + $0xc8] sm:$0xff]
    %v119 = vld [vmem:[#allocation2 + $0xd0] sm:$0xff]
    %v120 = vld [vmem:[#allocation2 + $0xd8] sm:$0xff]
    %v121 = vld [vmem:[#allocation2 + $0xe0] sm:$0xff]
    %v122 = vld [vmem:[#allocation2 + $0xe8] sm:$0xff]
    %v123 = vld [vmem:[#allocation2 + $0xf0] sm:$0xff]
    %v124 = vld [vmem:[#allocation2 + $0xf8] sm:$0xff]
    %v125 = vld [vmem:[#allocation2 + $0x100] sm:$0xff]
    %v126 = vld [vmem:[#allocation2 + $0x108] sm:$0xff]
    %v127 = vld [vmem:[#allocation2 + $0x110] sm:$0xff]
    %v128 = vld [vmem:[#allocation2 + $0x118] sm:$0xff]
    %v129 = vld [vmem:[#allocation2 + $0x120] sm:$0xff]
    %v130 = vld [vmem:[#allocation2 + $0x128] sm:$0xff]
    %v131 = vld [vmem:[#allocation2 + $0x130] sm:$0xff]
    %v132 = vld [vmem:[#allocation2 + $0x138] sm:$0xff]
    %v133 = vld [vmem:[#allocation2 + $0x140] sm:$0xff]
    %v134 = vld [vmem:[#allocation2 + $0x148] sm:$0xff]
    %v135 = vld [vmem:[#allocation2 + $0x150] sm:$0xff]
    %v136 = vld [vmem:[#allocation2 + $0x158] sm:$0xff]
    %v137 = vld [vmem:[#allocation2 + $0x160] sm:$0xff]
    %v138 = vld [vmem:[#allocation2 + $0x168] sm:$0xff]
    %v139 = vld [vmem:[#allocation2 + $0x170] sm:$0xff]
    %v140 = vld [vmem:[#allocation2 + $0x178] sm:$0xff]
    %v141 = vld [vmem:[#allocation2 + $0x180] sm:$0xff]
    %v142 = vld [vmem:[#allocation2 + $0x188] sm:$0xff]
    %v143 = vld [vmem:[#allocation2 + $0x190] sm:$0xff]
    %v144 = vld [vmem:[#allocation2 + $0x198] sm:$0xff]
    %v145 = vld [vmem:[#allocation2 + $0x1a0] sm:$0xff]
    %v146 = vld [vmem:[#allocation2 + $0x1a8] sm:$0xff]
    %v147 = vld [vmem:[#allocation2 + $0x1b0] sm:$0xff]
    %v148 = vld [vmem:[#allocation2 + $0x1b8] sm:$0xff]
    %v149 = vld [vmem:[#allocation2 + $0x1c0] sm:$0xff]
    %v150 = vld [vmem:[#allocation2 + $0x1c8] sm:$0xff]
    %v151 = vld [vmem:[#allocation2 + $0x1d0] sm:$0xff]
    %v152 = vld [vmem:[#allocation2 + $0x1d8] sm:$0xff]
    %v153 = vld [vmem:[#allocation2 + $0x1e0] sm:$0xff]
    %v154 = vld [vmem:[#allocation2 + $0x1e8] sm:$0xff]
    %v155 = vld [vmem:[#allocation2 + $0x1f0] sm:$0xff]
    %v156 = vld [vmem:[#allocation2 + $0x1f8] sm:$0xff]
    %v157 = vld [vmem:[#allocation2 + $0x200] sm:$0xff]
    %v158 = vld [vmem:[#allocation2 + $0x208] sm:$0xff]
    %v159 = vld [vmem:[#allocation2 + $0x210] sm:$0xff]
    %v160 = vld [vmem:[#allocation2 + $0x218] sm:$0xff]
    %v161 = vld [vmem:[#allocation2 + $0x220] sm:$0xff]
    %v162 = vld [vmem:[#allocation2 + $0x228] sm:$0xff]
    %v163 = vld [vmem:[#allocation2 + $0x230] sm:$0xff]
    %v164 = vld [vmem:[#allocation2 + $0x238] sm:$0xff]
    %v165 = vld [vmem:[#allocation2 + $0x240] sm:$0xff]
    %v166 = vld [vmem:[#allocation2 + $0x248] sm:$0xff]
    %v167 = vld [vmem:[#allocation2 + $0x250] sm:$0xff]
    %v168 = vld [vmem:[#allocation2 + $0x258] sm:$0xff]
    %v169 = vld [vmem:[#allocation2 + $0x260] sm:$0xff]
    %v170 = vld [vmem:[#allocation2 + $0x268] sm:$0xff]
    %v171 = vld [vmem:[#allocation2 + $0x270] sm:$0xff]
    %v172 = vld [vmem:[#allocation2 + $0x278] sm:$0xff]
    %v173 = vld [vmem:[#allocation2 + $0x280] sm:$0xff]
    %v174 = vld [vmem:[#allocation2 + $0x288] sm:$0xff]
    %v175 = vld [vmem:[#allocation2 + $0x290] sm:$0xff]
    %v176 = vld [vmem:[#allocation2 + $0x298] sm:$0xff]
    %v177 = vld [vmem:[#allocation2 + $0x2a0] sm:$0xff]
    %v178 = vld [vmem:[#allocation2 + $0x2a8] sm:$0xff]
    %v179 = vld [vmem:[#allocation2 + $0x2b0] sm:$0xff]
    %v180 = vld [vmem:[#allocation2 + $0x2b8] sm:$0xff]
    %v181 = vld [vmem:[#allocation2 + $0x2c0] sm:$0xff]
    %v182 = vld [vmem:[#allocation2 + $0x2c8] sm:$0xff]
    %v183 = vld [vmem:[#allocation2 + $0x2d0] sm:$0xff]
    %v184 = vld [vmem:[#allocation2 + $0x2d8] sm:$0xff]
    %v185 = vld [vmem:[#allocation2 + $0x2e0] sm:$0xff]
    %v186 = vld [vmem:[#allocation2 + $0x2e8] sm:$0xff]
    %v187 = vld [vmem:[#allocation2 + $0x2f0] sm:$0xff]
    %v188 = vld [vmem:[#allocation2 + $0x2f8] sm:$0xff]
    %v189 = vld [vmem:[#allocation2 + $0x300] sm:$0xff]
    %v190 = vld [vmem:[#allocation2 + $0x308] sm:$0xff]
    %v191 = vld [vmem:[#allocation2 + $0x310] sm:$0xff]
    %v192 = vld [vmem:[#allocation2 + $0x318] sm:$0xff]
    %v193 = vld [vmem:[#allocation2 + $0x320] sm:$0xff]
    %v194 = vld [vmem:[#allocation2 + $0x328] sm:$0xff]
    %v195 = vld [vmem:[#allocation2 + $0x330] sm:$0xff]
    %v196 = vld [vmem:[#allocation2 + $0x338] sm:$0xff]
    %v197 = vld [vmem:[#allocation2 + $0x340] sm:$0xff]
    %v198 = vld [vmem:[#allocation2 + $0x348] sm:$0xff]
    %v199 = vld [vmem:[#allocation2 + $0x350] sm:$0xff]
    %v200 = vld [vmem:[#allocation2 + $0x358] sm:$0xff]
    %v201 = vld [vmem:[#allocation2 + $0x360] sm:$0xff]
    %v202 = vld [vmem:[#allocation2 + $0x368] sm:$0xff]
    %v203 = vld [vmem:[#allocation2 + $0x370] sm:$0xff]
    %v204 = vld [vmem:[#allocation2 + $0x378] sm:$0xff]
    %v205 = vld [vmem:[#allocation2 + $0x380] sm:$0xff]
    %v206 = vld [vmem:[#allocation2 + $0x388] sm:$0xff]
    %v207 = vld [vmem:[#allocation2 + $0x390] sm:$0xff]
    %v208 = vld [vmem:[#allocation2 + $0x398] sm:$0xff]
    %v209 = vld [vmem:[#allocation2 + $0x3a0] sm:$0xff]
    %v210 = vld [vmem:[#allocation2 + $0x3a8] sm:$0xff]
    %v211 = vld [vmem:[#allocation2 + $0x3b0] sm:$0xff]
    %v212 = vld [vmem:[#allocation2 + $0x3b8] sm:$0xff]
    %v213 = vld [vmem:[#allocation2 + $0x3c0] sm:$0xff]
    %v214 = vld [vmem:[#allocation2 + $0x3c8] sm:$0xff]
    %v215 = vld [vmem:[#allocation2 + $0x3d0] sm:$0xff]
    %v216 = vld [vmem:[#allocation2 + $0x3d8] sm:$0xff]
    %v217 = vld [vmem:[#allocation2 + $0x3e0] sm:$0xff]
    %v218 = vld [vmem:[#allocation2 + $0x3e8] sm:$0xff]
    %v219 = vld [vmem:[#allocation2 + $0x3f0] sm:$0xff]
    %v220 = vld [vmem:[#allocation2 + $0x3f8] sm:$0xff]
    %v221 = vld [vmem:[#allocation2 + $0x400] sm:$0xff]
    %v222 = vld [vmem:[#allocation2 + $0x408] sm:$0xff]
    %v223 = vld [vmem:[#allocation2 + $0x410] sm:$0xff]
    %v224 = vld [vmem:[#allocation2 + $0x418] sm:$0xff]
    %v225 = vld [vmem:[#allocation2 + $0x420] sm:$0xff]
    %v226 = vld [vmem:[#allocation2 + $0x428] sm:$0xff]
    %v227 = vld [vmem:[#allocation2 + $0x430] sm:$0xff]
    %v228 = vld [vmem:[#allocation2 + $0x438] sm:$0xff]
    %v229 = vld [vmem:[#allocation2 + $0x440] sm:$0xff]
    %v230 = vld [vmem:[#allocation2 + $0x448] sm:$0xff]
    %v231 = vld [vmem:[#allocation2 + $0x450] sm:$0xff]
    %v232 = vld [vmem:[#allocation2 + $0x458] sm:$0xff]
    %v233 = vld [vmem:[#allocation2 + $0x460] sm:$0xff]
    %v234 = vld [vmem:[#allocation2 + $0x468] sm:$0xff]
    %v235 = vld [vmem:[#allocation2 + $0x470] sm:$0xff]
    %v236 = vld [vmem:[#allocation2 + $0x478] sm:$0xff]
    %v237 = vld [vmem:[#allocation2 + $0x480] sm:$0xff]
    %v238 = vld [vmem:[#allocation2 + $0x488] sm:$0xff]
    %v239 = vld [vmem:[#allocation2 + $0x490] sm:$0xff]
    %v240 = vld [vmem:[#allocation2 + $0x498] sm:$0xff]
    %v241 = vld [vmem:[#allocation2 + $0x4a0] sm:$0xff]
    %v242 = vld [vmem:[#allocation2 + $0x4a8] sm:$0xff]
    %v243 = vld [vmem:[#allocation2 + $0x4b0] sm:$0xff]
    %v244 = vld [vmem:[#allocation2 + $0x4b8] sm:$0xff]
    %v245 = vld [vmem:[#allocation2 + $0x4c0] sm:$0xff]
    %v246 = vld [vmem:[#allocation2 + $0x4c8] sm:$0xff]
    %v247 = vld [vmem:[#allocation2 + $0x4d0] sm:$0xff]
    %v248 = vld [vmem:[#allocation2 + $0x4d8] sm:$0xff]
    %v249 = vld [vmem:[#allocation2 + $0x4e0] sm:$0xff]
    %v250 = vld [vmem:[#allocation2 + $0x4e8] sm:$0xff]
    %v251 = vld [vmem:[#allocation2 + $0x4f0] sm:$0xff]
    %v252 = vld [vmem:[#allocation2 + $0x4f8] sm:$0xff]
    %v253 = vld [vmem:[#allocation2 + $0x500] sm:$0xff]
    %v254 = vld [vmem:[#allocation2 + $0x508] sm:$0xff]
    %v255 = vld [vmem:[#allocation2 + $0x510] sm:$0xff]
    %v256 = vld [vmem:[#allocation2 + $0x518] sm:$0xff]
    %v257 = vld [vmem:[#allocation2 + $0x520] sm:$0xff]
    %v258 = vld [vmem:[#allocation2 + $0x528] sm:$0xff]
    %v259 = vld [vmem:[#allocation2 + $0x530] sm:$0xff]
    %v260 = vld [vmem:[#allocation2 + $0x538] sm:$0xff]
    %v261 = vld [vmem:[#allocation2 + $0x540] sm:$0xff]
    %v262 = vld [vmem:[#allocation2 + $0x548] sm:$0xff]
    %v263 = vld [vmem:[#allocation2 + $0x550] sm:$0xff]
    %v264 = vld [vmem:[#allocation2 + $0x558] sm:$0xff]
    %v265 = vld [vmem:[#allocation2 + $0x560] sm:$0xff]
    %v266 = vld [vmem:[#allocation2 + $0x568] sm:$0xff]
    %v267 = vld [vmem:[#allocation2 + $0x570] sm:$0xff]
    %v268 = vld [vmem:[#allocation2 + $0x578] sm:$0xff]
    %v269 = vld [vmem:[#allocation2 + $0x580] sm:$0xff]
    %v270 = vld [vmem:[#allocation2 + $0x588] sm:$0xff]
    %v271 = vld [vmem:[#allocation2 + $0x590] sm:$0xff]
    %v272 = vld [vmem:[#allocation2 + $0x598] sm:$0xff]
    %v273 = vld [vmem:[#allocation2 + $0x5a0] sm:$0xff]
    %v274 = vld [vmem:[#allocation2 + $0x5a8] sm:$0xff]
    %v275 = vld [vmem:[#allocation2 + $0x5b0] sm:$0xff]
    %v276 = vld [vmem:[#allocation2 + $0x5b8] sm:$0xff]
    %v277 = vld [vmem:[#allocation2 + $0x5c0] sm:$0xff]
    %v278 = vld [vmem:[#allocation2 + $0x5c8] sm:$0xff]
    %v279 = vld [vmem:[#allocation2 + $0x5d0] sm:$0xff]
    %v280 = vld [vmem:[#allocation2 + $0x5d8] sm:$0xff]
    %v281 = vld [vmem:[#allocation2 + $0x5e0] sm:$0xff]
    %v282 = vld [vmem:[#allocation2 + $0x5e8] sm:$0xff]
    %v283 = vld [vmem:[#allocation2 + $0x5f0] sm:$0xff]
    %v284 = vld [vmem:[#allocation2 + $0x5f8] sm:$0xff]
    %v285 = vld [vmem:[#allocation2 + $0x600] sm:$0xff]
    %v286 = vld [vmem:[#allocation2 + $0x608] sm:$0xff]
    %v287 = vld [vmem:[#allocation2 + $0x610] sm:$0xff]
    %v288 = vld [vmem:[#allocation2 + $0x618] sm:$0xff]
    %v289 = vld [vmem:[%s2] sm:$0xf]
    %v291 = vperm.slane %v289, 0
    %v292 = vperm.slane %v289, 1
    %v293 = vperm.slane %v289, 2
    %v294 = vperm.slane %v289, 3
    %v495 = vunpack.c.l.b16 %v93
    %v496 = vunpack.c.h.b16 %v93
    %v497 = vunpack.c.l.b16 %v94
    %v498 = vunpack.c.h.b16 %v94
    %v499 = vunpack.c.l.b16 %v95
    %v500 = vunpack.c.h.b16 %v95
    %v501 = vunpack.c.l.b16 %v96
    %v502 = vunpack.c.h.b16 %v96
    %v503 = vunpack.c.l.b16 %v97
    %v504 = vunpack.c.h.b16 %v97
    %v505 = vunpack.c.l.b16 %v98
    %v506 = vunpack.c.h.b16 %v98
    %v507 = vunpack.c.l.b16 %v99
    %v508 = vunpack.c.h.b16 %v99
    %v509 = vunpack.c.l.b16 %v100
    %v510 = vunpack.c.h.b16 %v100
    %v511 = vunpack.c.l.b16 %v101
    %v512 = vunpack.c.h.b16 %v101
    %v513 = vunpack.c.l.b16 %v102
    %v514 = vunpack.c.h.b16 %v102
    %v515 = vunpack.c.l.b16 %v103
    %v516 = vunpack.c.h.b16 %v103
    %v517 = vunpack.c.l.b16 %v104
    %v518 = vunpack.c.h.b16 %v104
    %v519 = vunpack.c.l.b16 %v105
    %v520 = vunpack.c.h.b16 %v105
    %v521 = vunpack.c.l.b16 %v106
    %v522 = vunpack.c.h.b16 %v106
    %v523 = vunpack.c.l.b16 %v107
    %v524 = vunpack.c.h.b16 %v107
    %v525 = vunpack.c.l.b16 %v108
    %v526 = vunpack.c.h.b16 %v108
    %v527 = vunpack.c.l.b16 %v109
    %v528 = vunpack.c.h.b16 %v109
    %v529 = vunpack.c.l.b16 %v110
    %v530 = vunpack.c.h.b16 %v110
    %v531 = vunpack.c.l.b16 %v111
    %v532 = vunpack.c.h.b16 %v111
    %v533 = vunpack.c.l.b16 %v112
    %v534 = vunpack.c.h.b16 %v112
    %v535 = vunpack.c.l.b16 %v113
    %v536 = vunpack.c.h.b16 %v113
    %v537 = vunpack.c.l.b16 %v114
    %v538 = vunpack.c.h.b16 %v114
    %v539 = vunpack.c.l.b16 %v115
    %v540 = vunpack.c.h.b16 %v115
    %v541 = vunpack.c.l.b16 %v116
    %v542 = vunpack.c.h.b16 %v116
    %v543 = vunpack.c.l.b16 %v117
    %v544 = vunpack.c.h.b16 %v117
    %v545 = vunpack.c.l.b16 %v118
    %v546 = vunpack.c.h.b16 %v118
    %v547 = vunpack.c.l.b16 %v119
    %v548 = vunpack.c.h.b16 %v119
    %v549 = vunpack.c.l.b16 %v120
    %v550 = vunpack.c.h.b16 %v120
    %v551 = vunpack.c.l.b16 %v121
    %v552 = vunpack.c.h.b16 %v121
    %v553 = vunpack.c.l.b16 %v122
    %v554 = vunpack.c.h.b16 %v122
    %v555 = vunpack.c.l.b16 %v123
    %v556 = vunpack.c.h.b16 %v123
    %v557 = vunpack.c.l.b16 %v124
    %v558 = vunpack.c.h.b16 %v124
    %v559 = vunpack.c.l.b16 %v125
    %v560 = vunpack.c.h.b16 %v125
    %v561 = vunpack.c.l.b16 %v126
    %v562 = vunpack.c.h.b16 %v126
    %v563 = vunpack.c.l.b16 %v127
    %v564 = vunpack.c.h.b16 %v127
    %v565 = vunpack.c.l.b16 %v128
    %v566 = vunpack.c.h.b16 %v128
    %v567 = vunpack.c.l.b16 %v129
    %v568 = vunpack.c.h.b16 %v129
    %v569 = vunpack.c.l.b16 %v130
    %v570 = vunpack.c.h.b16 %v130
    %v571 = vunpack.c.l.b16 %v131
    %v572 = vunpack.c.h.b16 %v131
    %v573 = vunpack.c.l.b16 %v132
    %v574 = vunpack.c.h.b16 %v132
    %v575 = vunpack.c.l.b16 %v133
    %v576 = vunpack.c.h.b16 %v133
    %v577 = vunpack.c.l.b16 %v134
    %v578 = vunpack.c.h.b16 %v134
    %v579 = vunpack.c.l.b16 %v135
    %v580 = vunpack.c.h.b16 %v135
    %v581 = vunpack.c.l.b16 %v136
    %v582 = vunpack.c.h.b16 %v136
    %v583 = vunpack.c.l.b16 %v137
    %v584 = vunpack.c.h.b16 %v137
    %v585 = vunpack.c.l.b16 %v138
    %v586 = vunpack.c.h.b16 %v138
    %v587 = vunpack.c.l.b16 %v139
    %v588 = vunpack.c.h.b16 %v139
    %v589 = vunpack.c.l.b16 %v140
    %v590 = vunpack.c.h.b16 %v140
    %v591 = vunpack.c.l.b16 %v141
    %v592 = vunpack.c.h.b16 %v141
    %v593 = vunpack.c.l.b16 %v142
    %v594 = vunpack.c.h.b16 %v142
    %v595 = vunpack.c.l.b16 %v143
    %v596 = vunpack.c.h.b16 %v143
    %v597 = vunpack.c.l.b16 %v144
    %v598 = vunpack.c.h.b16 %v144
    %v599 = vunpack.c.l.b16 %v145
    %v600 = vunpack.c.h.b16 %v145
    %v601 = vunpack.c.l.b16 %v146
    %v602 = vunpack.c.h.b16 %v146
    %v603 = vunpack.c.l.b16 %v147
    %v604 = vunpack.c.h.b16 %v147
    %v605 = vunpack.c.l.b16 %v148
    %v606 = vunpack.c.h.b16 %v148
    %v607 = vunpack.c.l.b16 %v149
    %v608 = vunpack.c.h.b16 %v149
    %v609 = vunpack.c.l.b16 %v150
    %v610 = vunpack.c.h.b16 %v150
    %v611 = vunpack.c.l.b16 %v151
    %v612 = vunpack.c.h.b16 %v151
    %v613 = vunpack.c.l.b16 %v152
    %v614 = vunpack.c.h.b16 %v152
    %v615 = vunpack.c.l.b16 %v153
    %v616 = vunpack.c.h.b16 %v153
    %v617 = vunpack.c.l.b16 %v154
    %v618 = vunpack.c.h.b16 %v154
    %v619 = vunpack.c.l.b16 %v155
    %v620 = vunpack.c.h.b16 %v155
    %v621 = vunpack.c.l.b16 %v156
    %v622 = vunpack.c.h.b16 %v156
    %v623 = vunpack.c.l.b16 %v157
    %v624 = vunpack.c.h.b16 %v157
    %v625 = vunpack.c.l.b16 %v158
    %v626 = vunpack.c.h.b16 %v158
    %v627 = vunpack.c.l.b16 %v159
    %v628 = vunpack.c.h.b16 %v159
    %v629 = vunpack.c.l.b16 %v160
    %v630 = vunpack.c.h.b16 %v160
    %v631 = vunpack.c.l.b16 %v161
    %v632 = vunpack.c.h.b16 %v161
    %v633 = vunpack.c.l.b16 %v162
    %v634 = vunpack.c.h.b16 %v162
    %v635 = vunpack.c.l.b16 %v163
    %v636 = vunpack.c.h.b16 %v163
    %v637 = vunpack.c.l.b16 %v164
    %v638 = vunpack.c.h.b16 %v164
    %v639 = vunpack.c.l.b16 %v165
    %v640 = vunpack.c.h.b16 %v165
    %v641 = vunpack.c.l.b16 %v166
    %v642 = vunpack.c.h.b16 %v166
    %v643 = vunpack.c.l.b16 %v167
    %v644 = vunpack.c.h.b16 %v167
    %v645 = vunpack.c.l.b16 %v168
    %v646 = vunpack.c.h.b16 %v168
    %v647 = vunpack.c.l.b16 %v169
    %v648 = vunpack.c.h.b16 %v169
    %v649 = vunpack.c.l.b16 %v170
    %v650 = vunpack.c.h.b16 %v170
    %v651 = vunpack.c.l.b16 %v171
    %v652 = vunpack.c.h.b16 %v171
    %v653 = vunpack.c.l.b16 %v172
    %v654 = vunpack.c.h.b16 %v172
    %v655 = vunpack.c.l.b16 %v173
    %v656 = vunpack.c.h.b16 %v173
    %v657 = vunpack.c.l.b16 %v174
    %v658 = vunpack.c.h.b16 %v174
    %v659 = vunpack.c.l.b16 %v175
    %v660 = vunpack.c.h.b16 %v175
    %v661 = vunpack.c.l.b16 %v176
    %v662 = vunpack.c.h.b16 %v176
    %v663 = vunpack.c.l.b16 %v177
    %v664 = vunpack.c.h.b16 %v177
    %v665 = vunpack.c.l.b16 %v178
    %v666 = vunpack.c.h.b16 %v178
    %v667 = vunpack.c.l.b16 %v179
    %v668 = vunpack.c.h.b16 %v179
    %v669 = vunpack.c.l.b16 %v180
    %v670 = vunpack.c.h.b16 %v180
    %v671 = vunpack.c.l.b16 %v181
    %v672 = vunpack.c.h.b16 %v181
    %v673 = vunpack.c.l.b16 %v182
    %v674 = vunpack.c.h.b16 %v182
    %v675 = vunpack.c.l.b16 %v183
    %v676 = vunpack.c.h.b16 %v183
    %v677 = vunpack.c.l.b16 %v184
    %v678 = vunpack.c.h.b16 %v184
    %v679 = vunpack.c.l.b16 %v185
    %v680 = vunpack.c.h.b16 %v185
    %v681 = vunpack.c.l.b16 %v186
    %v682 = vunpack.c.h.b16 %v186
    %v683 = vunpack.c.l.b16 %v187
    %v684 = vunpack.c.h.b16 %v187
    %v685 = vunpack.c.l.b16 %v188
    %v686 = vunpack.c.h.b16 %v188
    %v687 = vunpack.c.l.b16 %v189
    %v688 = vunpack.c.h.b16 %v189
    %v689 = vunpack.c.l.b16 %v190
    %v690 = vunpack.c.h.b16 %v190
    %v691 = vunpack.c.l.b16 %v191
    %v692 = vunpack.c.h.b16 %v191
    %v693 = vunpack.c.l.b16 %v192
    %v694 = vunpack.c.h.b16 %v192
    %v695 = vunpack.c.l.b16 %v193
    %v696 = vunpack.c.h.b16 %v193
    %v697 = vunpack.c.l.b16 %v194
    %v698 = vunpack.c.h.b16 %v194
    %v699 = vunpack.c.l.b16 %v195
    %v700 = vunpack.c.h.b16 %v195
    %v701 = vunpack.c.l.b16 %v196
    %v702 = vunpack.c.h.b16 %v196
    %v703 = vunpack.c.l.b16 %v197
    %v704 = vunpack.c.h.b16 %v197
    %v705 = vunpack.c.l.b16 %v198
    %v706 = vunpack.c.h.b16 %v198
    %v707 = vunpack.c.l.b16 %v199
    %v708 = vunpack.c.h.b16 %v199
    %v709 = vunpack.c.l.b16 %v200
    %v710 = vunpack.c.h.b16 %v200
    %v711 = vunpack.c.l.b16 %v201
    %v712 = vunpack.c.h.b16 %v201
    %v713 = vunpack.c.l.b16 %v202
    %v714 = vunpack.c.h.b16 %v202
    %v715 = vunpack.c.l.b16 %v203
    %v716 = vunpack.c.h.b16 %v203
    %v717 = vunpack.c.l.b16 %v204
    %v718 = vunpack.c.h.b16 %v204
    %v719 = vunpack.c.l.b16 %v205
    %v720 = vunpack.c.h.b16 %v205
    %v721 = vunpack.c.l.b16 %v206
    %v722 = vunpack.c.h.b16 %v206
    %v723 = vunpack.c.l.b16 %v207
    %v724 = vunpack.c.h.b16 %v207
    %v725 = vunpack.c.l.b16 %v208
    %v726 = vunpack.c.h.b16 %v208
    %v727 = vunpack.c.l.b16 %v209
    %v728 = vunpack.c.h.b16 %v209
    %v729 = vunpack.c.l.b16 %v210
    %v730 = vunpack.c.h.b16 %v210
    %v731 = vunpack.c.l.b16 %v211
    %v732 = vunpack.c.h.b16 %v211
    %v733 = vunpack.c.l.b16 %v212
    %v734 = vunpack.c.h.b16 %v212
    %v735 = vunpack.c.l.b16 %v213
    %v736 = vunpack.c.h.b16 %v213
    %v737 = vunpack.c.l.b16 %v214
    %v738 = vunpack.c.h.b16 %v214
    %v739 = vunpack.c.l.b16 %v215
    %v740 = vunpack.c.h.b16 %v215
    %v741 = vunpack.c.l.b16 %v216
    %v742 = vunpack.c.h.b16 %v216
    %v743 = vunpack.c.l.b16 %v217
    %v744 = vunpack.c.h.b16 %v217
    %v745 = vunpack.c.l.b16 %v218
    %v746 = vunpack.c.h.b16 %v218
    %v747 = vunpack.c.l.b16 %v219
    %v748 = vunpack.c.h.b16 %v219
    %v749 = vunpack.c.l.b16 %v220
    %v750 = vunpack.c.h.b16 %v220
    %v751 = vunpack.c.l.b16 %v221
    %v752 = vunpack.c.h.b16 %v221
    %v753 = vunpack.c.l.b16 %v222
    %v754 = vunpack.c.h.b16 %v222
    %v755 = vunpack.c.l.b16 %v223
    %v756 = vunpack.c.h.b16 %v223
    %v757 = vunpack.c.l.b16 %v224
    %v758 = vunpack.c.h.b16 %v224
    %v759 = vunpack.c.l.b16 %v225
    %v760 = vunpack.c.h.b16 %v225
    %v761 = vunpack.c.l.b16 %v226
    %v762 = vunpack.c.h.b16 %v226
    %v763 = vunpack.c.l.b16 %v227
    %v764 = vunpack.c.h.b16 %v227
    %v765 = vunpack.c.l.b16 %v228
    %v766 = vunpack.c.h.b16 %v228
    %v767 = vunpack.c.l.b16 %v229
    %v768 = vunpack.c.h.b16 %v229
    %v769 = vunpack.c.l.b16 %v230
    %v770 = vunpack.c.h.b16 %v230
    %v771 = vunpack.c.l.b16 %v231
    %v772 = vunpack.c.h.b16 %v231
    %v773 = vunpack.c.l.b16 %v232
    %v774 = vunpack.c.h.b16 %v232
    %v775 = vunpack.c.l.b16 %v233
    %v776 = vunpack.c.h.b16 %v233
    %v777 = vunpack.c.l.b16 %v234
    %v778 = vunpack.c.h.b16 %v234
    %v779 = vunpack.c.l.b16 %v235
    %v780 = vunpack.c.h.b16 %v235
    %v781 = vunpack.c.l.b16 %v236
    %v782 = vunpack.c.h.b16 %v236
    %v783 = vunpack.c.l.b16 %v237
    %v784 = vunpack.c.h.b16 %v237
    %v785 = vunpack.c.l.b16 %v238
    %v786 = vunpack.c.h.b16 %v238
    %v787 = vunpack.c.l.b16 %v239
    %v788 = vunpack.c.h.b16 %v239
    %v789 = vunpack.c.l.b16 %v240
    %v790 = vunpack.c.h.b16 %v240
    %v791 = vunpack.c.l.b16 %v241
    %v792 = vunpack.c.h.b16 %v241
    %v793 = vunpack.c.l.b16 %v242
    %v794 = vunpack.c.h.b16 %v242
    %v795 = vunpack.c.l.b16 %v243
    %v796 = vunpack.c.h.b16 %v243
    %v797 = vunpack.c.l.b16 %v244
    %v798 = vunpack.c.h.b16 %v244
    %v799 = vunpack.c.l.b16 %v245
    %v800 = vunpack.c.h.b16 %v245
    %v801 = vunpack.c.l.b16 %v246
    %v802 = vunpack.c.h.b16 %v246
    %v803 = vunpack.c.l.b16 %v247
    %v804 = vunpack.c.h.b16 %v247
    %v805 = vunpack.c.l.b16 %v248
    %v806 = vunpack.c.h.b16 %v248
    %v807 = vunpack.c.l.b16 %v249
    %v808 = vunpack.c.h.b16 %v249
    %v809 = vunpack.c.l.b16 %v250
    %v810 = vunpack.c.h.b16 %v250
    %v811 = vunpack.c.l.b16 %v251
    %v812 = vunpack.c.h.b16 %v251
    %v813 = vunpack.c.l.b16 %v252
    %v814 = vunpack.c.h.b16 %v252
    %v815 = vunpack.c.l.b16 %v253
    %v816 = vunpack.c.h.b16 %v253
    %v817 = vunpack.c.l.b16 %v254
    %v818 = vunpack.c.h.b16 %v254
    %v819 = vunpack.c.l.b16 %v255
    %v820 = vunpack.c.h.b16 %v255
    %v821 = vunpack.c.l.b16 %v256
    %v822 = vunpack.c.h.b16 %v256
    %v823 = vunpack.c.l.b16 %v257
    %v824 = vunpack.c.h.b16 %v257
    %v825 = vunpack.c.l.b16 %v258
    %v826 = vunpack.c.h.b16 %v258
    %v827 = vunpack.c.l.b16 %v259
    %v828 = vunpack.c.h.b16 %v259
    %v829 = vunpack.c.l.b16 %v260
    %v830 = vunpack.c.h.b16 %v260
    %v831 = vunpack.c.l.b16 %v261
    %v832 = vunpack.c.h.b16 %v261
    %v833 = vunpack.c.l.b16 %v262
    %v834 = vunpack.c.h.b16 %v262
    %v835 = vunpack.c.l.b16 %v263
    %v836 = vunpack.c.h.b16 %v263
    %v837 = vunpack.c.l.b16 %v264
    %v838 = vunpack.c.h.b16 %v264
    %v839 = vunpack.c.l.b16 %v265
    %v840 = vunpack.c.h.b16 %v265
    %v841 = vunpack.c.l.b16 %v266
    %v842 = vunpack.c.h.b16 %v266
    %v843 = vunpack.c.l.b16 %v267
    %v844 = vunpack.c.h.b16 %v267
    %v845 = vunpack.c.l.b16 %v268
    %v846 = vunpack.c.h.b16 %v268
    %v847 = vunpack.c.l.b16 %v269
    %v848 = vunpack.c.h.b16 %v269
    %v849 = vunpack.c.l.b16 %v270
    %v850 = vunpack.c.h.b16 %v270
    %v851 = vunpack.c.l.b16 %v271
    %v852 = vunpack.c.h.b16 %v271
    %v853 = vunpack.c.l.b16 %v272
    %v854 = vunpack.c.h.b16 %v272
    %v855 = vunpack.c.l.b16 %v273
    %v856 = vunpack.c.h.b16 %v273
    %v857 = vunpack.c.l.b16 %v274
    %v858 = vunpack.c.h.b16 %v274
    %v859 = vunpack.c.l.b16 %v275
    %v860 = vunpack.c.h.b16 %v275
    %v861 = vunpack.c.l.b16 %v276
    %v862 = vunpack.c.h.b16 %v276
    %v863 = vunpack.c.l.b16 %v277
    %v864 = vunpack.c.h.b16 %v277
    %v865 = vunpack.c.l.b16 %v278
    %v866 = vunpack.c.h.b16 %v278
    %v867 = vunpack.c.l.b16 %v279
    %v868 = vunpack.c.h.b16 %v279
    %v869 = vunpack.c.l.b16 %v280
    %v870 = vunpack.c.h.b16 %v280
    %v871 = vunpack.c.l.b16 %v281
    %v872 = vunpack.c.h.b16 %v281
    %v873 = vunpack.c.l.b16 %v282
    %v874 = vunpack.c.h.b16 %v282
    %v875 = vunpack.c.l.b16 %v283
    %v876 = vunpack.c.h.b16 %v283
    %v877 = vunpack.c.l.b16 %v284
    %v878 = vunpack.c.h.b16 %v284
    %v879 = vunpack.c.l.b16 %v285
    %v880 = vunpack.c.h.b16 %v285
    %v881 = vunpack.c.l.b16 %v286
    %v882 = vunpack.c.h.b16 %v286
    %v883 = vunpack.c.l.b16 %v287
    %v884 = vunpack.c.h.b16 %v287
    %v885 = vunpack.c.l.b16 %v288
    %v886 = vunpack.c.h.b16 %v288
    %v887 = vpack.c.b16 %v499, %v495
    %v888 = vpack.c.b16 %v500, %v496
    %v889 = vpack.c.b16 %v501, %v497
    %v890 = vpack.c.b16 %v502, %v498
    %v891 = vpack.c.b16 %v507, %v503
    %v892 = vpack.c.b16 %v508, %v504
    %v893 = vpack.c.b16 %v509, %v505
    %v894 = vpack.c.b16 %v510, %v506
    %v895 = vpack.c.b16 %v515, %v511
    %v896 = vpack.c.b16 %v516, %v512
    %v897 = vpack.c.b16 %v517, %v513
    %v898 = vpack.c.b16 %v518, %v514
    %v899 = vpack.c.b16 %v523, %v519
    %v900 = vpack.c.b16 %v524, %v520
    %v901 = vpack.c.b16 %v525, %v521
    %v902 = vpack.c.b16 %v526, %v522
    %v903 = vpack.c.b16 %v531, %v527
    %v904 = vpack.c.b16 %v532, %v528
    %v905 = vpack.c.b16 %v533, %v529
    %v906 = vpack.c.b16 %v534, %v530
    %v907 = vpack.c.b16 %v539, %v535
    %v908 = vpack.c.b16 %v540, %v536
    %v909 = vpack.c.b16 %v541, %v537
    %v910 = vpack.c.b16 %v542, %v538
    %v911 = vpack.c.b16 %v547, %v543
    %v912 = vpack.c.b16 %v548, %v544
    %v913 = vpack.c.b16 %v549, %v545
    %v914 = vpack.c.b16 %v550, %v546
    %v915 = vpack.c.b16 %v555, %v551
    %v916 = vpack.c.b16 %v556, %v552
    %v917 = vpack.c.b16 %v557, %v553
    %v918 = vpack.c.b16 %v558, %v554
    %v919 = vpack.c.b16 %v563, %v559
    %v920 = vpack.c.b16 %v564, %v560
    %v921 = vpack.c.b16 %v565, %v561
    %v922 = vpack.c.b16 %v566, %v562
    %v923 = vpack.c.b16 %v571, %v567
    %v924 = vpack.c.b16 %v572, %v568
    %v925 = vpack.c.b16 %v573, %v569
    %v926 = vpack.c.b16 %v574, %v570
    %v927 = vpack.c.b16 %v579, %v575
    %v928 = vpack.c.b16 %v580, %v576
    %v929 = vpack.c.b16 %v581, %v577
    %v930 = vpack.c.b16 %v582, %v578
    %v931 = vpack.c.b16 %v587, %v583
    %v932 = vpack.c.b16 %v588, %v584
    %v933 = vpack.c.b16 %v589, %v585
    %v934 = vpack.c.b16 %v590, %v586
    %v935 = vpack.c.b16 %v595, %v591
    %v936 = vpack.c.b16 %v596, %v592
    %v937 = vpack.c.b16 %v597, %v593
    %v938 = vpack.c.b16 %v598, %v594
    %v939 = vpack.c.b16 %v603, %v599
    %v940 = vpack.c.b16 %v604, %v600
    %v941 = vpack.c.b16 %v605, %v601
    %v942 = vpack.c.b16 %v606, %v602
    %v943 = vpack.c.b16 %v611, %v607
    %v944 = vpack.c.b16 %v612, %v608
    %v945 = vpack.c.b16 %v613, %v609
    %v946 = vpack.c.b16 %v614, %v610
    %v947 = vpack.c.b16 %v619, %v615
    %v948 = vpack.c.b16 %v620, %v616
    %v949 = vpack.c.b16 %v621, %v617
    %v950 = vpack.c.b16 %v622, %v618
    %v951 = vpack.c.b16 %v627, %v623
    %v952 = vpack.c.b16 %v628, %v624
    %v953 = vpack.c.b16 %v629, %v625
    %v954 = vpack.c.b16 %v630, %v626
    %v955 = vpack.c.b16 %v635, %v631
    %v956 = vpack.c.b16 %v636, %v632
    %v957 = vpack.c.b16 %v637, %v633
    %v958 = vpack.c.b16 %v638, %v634
    %v959 = vpack.c.b16 %v643, %v639
    %v960 = vpack.c.b16 %v644, %v640
    %v961 = vpack.c.b16 %v645, %v641
    %v962 = vpack.c.b16 %v646, %v642
    %v963 = vpack.c.b16 %v651, %v647
    %v964 = vpack.c.b16 %v652, %v648
    %v965 = vpack.c.b16 %v653, %v649
    %v966 = vpack.c.b16 %v654, %v650
    %v967 = vpack.c.b16 %v659, %v655
    %v968 = vpack.c.b16 %v660, %v656
    %v969 = vpack.c.b16 %v661, %v657
    %v970 = vpack.c.b16 %v662, %v658
    %v971 = vpack.c.b16 %v667, %v663
    %v972 = vpack.c.b16 %v668, %v664
    %v973 = vpack.c.b16 %v669, %v665
    %v974 = vpack.c.b16 %v670, %v666
    %v975 = vpack.c.b16 %v675, %v671
    %v976 = vpack.c.b16 %v676, %v672
    %v977 = vpack.c.b16 %v677, %v673
    %v978 = vpack.c.b16 %v678, %v674
    %v979 = vpack.c.b16 %v683, %v679
    %v980 = vpack.c.b16 %v684, %v680
    %v981 = vpack.c.b16 %v685, %v681
    %v982 = vpack.c.b16 %v686, %v682
    %v983 = vpack.c.b16 %v691, %v687
    %v984 = vpack.c.b16 %v692, %v688
    %v985 = vpack.c.b16 %v693, %v689
    %v986 = vpack.c.b16 %v694, %v690
    %v987 = vpack.c.b16 %v699, %v695
    %v988 = vpack.c.b16 %v700, %v696
    %v989 = vpack.c.b16 %v701, %v697
    %v990 = vpack.c.b16 %v702, %v698
    %v991 = vpack.c.b16 %v707, %v703
    %v992 = vpack.c.b16 %v708, %v704
    %v993 = vpack.c.b16 %v709, %v705
    %v994 = vpack.c.b16 %v710, %v706
    %v995 = vpack.c.b16 %v715, %v711
    %v996 = vpack.c.b16 %v716, %v712
    %v997 = vpack.c.b16 %v717, %v713
    %v998 = vpack.c.b16 %v718, %v714
    %v999 = vpack.c.b16 %v723, %v719
    %v1000 = vpack.c.b16 %v724, %v720
    %v1001 = vpack.c.b16 %v725, %v721
    %v1002 = vpack.c.b16 %v726, %v722
    %v1003 = vpack.c.b16 %v731, %v727
    %v1004 = vpack.c.b16 %v732, %v728
    %v1005 = vpack.c.b16 %v733, %v729
    %v1006 = vpack.c.b16 %v734, %v730
    %v1007 = vpack.c.b16 %v739, %v735
    %v1008 = vpack.c.b16 %v740, %v736
    %v1009 = vpack.c.b16 %v741, %v737
    %v1010 = vpack.c.b16 %v742, %v738
    %v1011 = vpack.c.b16 %v747, %v743
    %v1012 = vpack.c.b16 %v748, %v744
    %v1013 = vpack.c.b16 %v749, %v745
    %v1014 = vpack.c.b16 %v750, %v746
    %v1015 = vpack.c.b16 %v755, %v751
    %v1016 = vpack.c.b16 %v756, %v752
    %v1017 = vpack.c.b16 %v757, %v753
    %v1018 = vpack.c.b16 %v758, %v754
    %v1019 = vpack.c.b16 %v763, %v759
    %v1020 = vpack.c.b16 %v764, %v760
    %v1021 = vpack.c.b16 %v765, %v761
    %v1022 = vpack.c.b16 %v766, %v762
    %v1023 = vpack.c.b16 %v771, %v767
    %v1024 = vpack.c.b16 %v772, %v768
    %v1025 = vpack.c.b16 %v773, %v769
    %v1026 = vpack.c.b16 %v774, %v770
    %v1027 = vpack.c.b16 %v779, %v775
    %v1028 = vpack.c.b16 %v780, %v776
    %v1029 = vpack.c.b16 %v781, %v777
    %v1030 = vpack.c.b16 %v782, %v778
    %v1031 = vpack.c.b16 %v787, %v783
    %v1032 = vpack.c.b16 %v788, %v784
    %v1033 = vpack.c.b16 %v789, %v785
    %v1034 = vpack.c.b16 %v790, %v786
    %v1035 = vpack.c.b16 %v795, %v791
    %v1036 = vpack.c.b16 %v796, %v792
    %v1037 = vpack.c.b16 %v797, %v793
    %v1038 = vpack.c.b16 %v798, %v794
    %v1039 = vpack.c.b16 %v803, %v799
    %v1040 = vpack.c.b16 %v804, %v800
    %v1041 = vpack.c.b16 %v805, %v801
    %v1042 = vpack.c.b16 %v806, %v802
    %v1043 = vpack.c.b16 %v811, %v807
    %v1044 = vpack.c.b16 %v812, %v808
    %v1045 = vpack.c.b16 %v813, %v809
    %v1046 = vpack.c.b16 %v814, %v810
    %v1047 = vpack.c.b16 %v819, %v815
    %v1048 = vpack.c.b16 %v820, %v816
    %v1049 = vpack.c.b16 %v821, %v817
    %v1050 = vpack.c.b16 %v822, %v818
    %v1051 = vpack.c.b16 %v827, %v823
    %v1052 = vpack.c.b16 %v828, %v824
    %v1053 = vpack.c.b16 %v829, %v825
    %v1054 = vpack.c.b16 %v830, %v826
    %v1055 = vpack.c.b16 %v835, %v831
    %v1056 = vpack.c.b16 %v836, %v832
    %v1057 = vpack.c.b16 %v837, %v833
    %v1058 = vpack.c.b16 %v838, %v834
    %v1059 = vpack.c.b16 %v843, %v839
    %v1060 = vpack.c.b16 %v844, %v840
    %v1061 = vpack.c.b16 %v845, %v841
    %v1062 = vpack.c.b16 %v846, %v842
    %v1063 = vpack.c.b16 %v851, %v847
    %v1064 = vpack.c.b16 %v852, %v848
    %v1065 = vpack.c.b16 %v853, %v849
    %v1066 = vpack.c.b16 %v854, %v850
    %v1067 = vpack.c.b16 %v859, %v855
    %v1068 = vpack.c.b16 %v860, %v856
    %v1069 = vpack.c.b16 %v861, %v857
    %v1070 = vpack.c.b16 %v862, %v858
    %v1071 = vpack.c.b16 %v867, %v863
    %v1072 = vpack.c.b16 %v868, %v864
    %v1073 = vpack.c.b16 %v869, %v865
    %v1074 = vpack.c.b16 %v870, %v866
    %v1075 = vpack.c.b16 %v875, %v871
    %v1076 = vpack.c.b16 %v876, %v872
    %v1077 = vpack.c.b16 %v877, %v873
    %v1078 = vpack.c.b16 %v878, %v874
    %v1079 = vpack.c.b16 %v883, %v879
    %v1080 = vpack.c.b16 %v884, %v880
    %v1081 = vpack.c.b16 %v885, %v881
    %v1082 = vpack.c.b16 %v886, %v882
    %vm1279 = vcmask 130048
    %v1281 = vsel %vm1279, %v92, 0
    %1283 = vmatpush.bf16.msra.mxu0 %v915
    %1284 = vmatpush.bf16.msra.mxu0 %v911
    %1285 = vmatpush.bf16.msra.mxu0 %v907
    %1286 = vmatpush.bf16.msra.mxu0 %v903
    %1287 = vmatpush.bf16.msra.mxu0 %v899
    %1288 = vmatpush.bf16.msra.mxu0 %v895
    %1289 = vmatpush.bf16.msra.mxu0 %v891
    %1290 = vmatpush.bf16.msra.mxu0 %v887
    %1291 = vmatmul.bf16.gmra.mxu0 %v86
    %v1292 = vpop.f32.mrf.mxu0
    %v1293 = vadd.f32 %v291, %v1292
    %v1294 = vpop.f32.mrf.mxu0
    %1295 = vdwg.mxu0
    %1296 = vmatpush.bf16.msra.mxu0 %v947
    %1297 = vmatpush.bf16.msra.mxu0 %v943
    %1298 = vmatpush.bf16.msra.mxu0 %v939
    %1299 = vmatpush.bf16.msra.mxu0 %v935
    %1300 = vmatpush.bf16.msra.mxu0 %v931
    %1301 = vmatpush.bf16.msra.mxu0 %v927
    %1302 = vmatpush.bf16.msra.mxu0 %v923
    %1303 = vmatpush.bf16.msra.mxu0 %v919
    %1304 = vmatmul.bf16.gmra.mxu0 %v87
    %v1305 = vpop.f32.mrf.mxu0
    %v1306 = vadd.f32 %v1293, %v1305
    %v1307 = vpop.f32.mrf.mxu0
    %1308 = vdwg.mxu0
    %1309 = vmatpush.bf16.msra.mxu0 %v979
    %1310 = vmatpush.bf16.msra.mxu0 %v975
    %1311 = vmatpush.bf16.msra.mxu0 %v971
    %1312 = vmatpush.bf16.msra.mxu0 %v967
    %1313 = vmatpush.bf16.msra.mxu0 %v963
    %1314 = vmatpush.bf16.msra.mxu0 %v959
    %1315 = vmatpush.bf16.msra.mxu0 %v955
    %1316 = vmatpush.bf16.msra.mxu0 %v951
    %1317 = vmatmul.bf16.gmra.mxu0 %v88
    %v1318 = vpop.f32.mrf.mxu0
    %v1319 = vadd.f32 %v1306, %v1318
    %v1320 = vpop.f32.mrf.mxu0
    %1321 = vdwg.mxu0
    %1322 = vmatpush.bf16.msra.mxu0 %v1011
    %1323 = vmatpush.bf16.msra.mxu0 %v1007
    %1324 = vmatpush.bf16.msra.mxu0 %v1003
    %1325 = vmatpush.bf16.msra.mxu0 %v999
    %1326 = vmatpush.bf16.msra.mxu0 %v995
    %1327 = vmatpush.bf16.msra.mxu0 %v991
    %1328 = vmatpush.bf16.msra.mxu0 %v987
    %1329 = vmatpush.bf16.msra.mxu0 %v983
    %1330 = vmatmul.bf16.gmra.mxu0 %v89
    %v1331 = vpop.f32.mrf.mxu0
    %v1332 = vadd.f32 %v1319, %v1331
    %v1333 = vpop.f32.mrf.mxu0
    %1334 = vdwg.mxu0
    %1335 = vmatpush.bf16.msra.mxu0 %v1043
    %1336 = vmatpush.bf16.msra.mxu0 %v1039
    %1337 = vmatpush.bf16.msra.mxu0 %v1035
    %1338 = vmatpush.bf16.msra.mxu0 %v1031
    %1339 = vmatpush.bf16.msra.mxu0 %v1027
    %1340 = vmatpush.bf16.msra.mxu0 %v1023
    %1341 = vmatpush.bf16.msra.mxu0 %v1019
    %1342 = vmatpush.bf16.msra.mxu0 %v1015
    %1343 = vmatmul.bf16.gmra.mxu0 %v90
    %v1344 = vpop.f32.mrf.mxu0
    %v1345 = vadd.f32 %v1332, %v1344
    %v1346 = vpop.f32.mrf.mxu0
    %1347 = vdwg.mxu0
    %1348 = vmatpush.bf16.msra.mxu0 %v1075
    %1349 = vmatpush.bf16.msra.mxu0 %v1071
    %1350 = vmatpush.bf16.msra.mxu0 %v1067
    %1351 = vmatpush.bf16.msra.mxu0 %v1063
    %1352 = vmatpush.bf16.msra.mxu0 %v1059
    %1353 = vmatpush.bf16.msra.mxu0 %v1055
    %1354 = vmatpush.bf16.msra.mxu0 %v1051
    %1355 = vmatpush.bf16.msra.mxu0 %v1047
    %1356 = vmatmul.bf16.gmra.mxu0 %v91
    %v1357 = vpop.f32.mrf.mxu0
    %v1358 = vadd.f32 %v1345, %v1357
    %v1359 = vpop.f32.mrf.mxu0
    %1360 = vdwg.mxu0
    %1361 = vmatpush.bf16.msra.mxu0 0
    %1362 = vmatpush.bf16.msra.mxu0 0
    %1363 = vmatpush.bf16.msra.mxu0 0
    %1364 = vmatpush.bf16.msra.mxu0 0
    %1365 = vmatpush.bf16.msra.mxu0 0
    %1366 = vmatpush.bf16.msra.mxu0 0
    %1367 = vmatpush.bf16.msra.mxu0 0
    %1368 = vmatpush.bf16.msra.mxu0 %v1079
    %1369 = vmatmul.bf16.gmra.mxu0 %v1281
    %v1370 = vpop.f32.mrf.mxu0
    %v1371 = vadd.f32 %v1358, %v1370
    %v1372 = vpop.f32.mrf.mxu0
    %1373 = vdwg.mxu0
    %1374 = vmatpush.bf16.msra.mxu0 %v916
    %1375 = vmatpush.bf16.msra.mxu0 %v912
    %1376 = vmatpush.bf16.msra.mxu0 %v908
    %1377 = vmatpush.bf16.msra.mxu0 %v904
    %1378 = vmatpush.bf16.msra.mxu0 %v900
    %1379 = vmatpush.bf16.msra.mxu0 %v896
    %1380 = vmatpush.bf16.msra.mxu0 %v892
    %1381 = vmatpush.bf16.msra.mxu0 %v888
    %1382 = vmatmul.bf16.gmra.mxu0 %v86
    %v1383 = vpop.f32.mrf.mxu0
    %v1384 = vadd.f32 %v292, %v1383
    %v1385 = vpop.f32.mrf.mxu0
    %1386 = vdwg.mxu0
    %1387 = vmatpush.bf16.msra.mxu0 %v948
    %1388 = vmatpush.bf16.msra.mxu0 %v944
    %1389 = vmatpush.bf16.msra.mxu0 %v940
    %1390 = vmatpush.bf16.msra.mxu0 %v936
    %1391 = vmatpush.bf16.msra.mxu0 %v932
    %1392 = vmatpush.bf16.msra.mxu0 %v928
    %1393 = vmatpush.bf16.msra.mxu0 %v924
    %1394 = vmatpush.bf16.msra.mxu0 %v920
    %1395 = vmatmul.bf16.gmra.mxu0 %v87
    %v1396 = vpop.f32.mrf.mxu0
    %v1397 = vadd.f32 %v1384, %v1396
    %v1398 = vpop.f32.mrf.mxu0
    %1399 = vdwg.mxu0
    %1400 = vmatpush.bf16.msra.mxu0 %v980
    %1401 = vmatpush.bf16.msra.mxu0 %v976
    %1402 = vmatpush.bf16.msra.mxu0 %v972
    %1403 = vmatpush.bf16.msra.mxu0 %v968
    %1404 = vmatpush.bf16.msra.mxu0 %v964
    %1405 = vmatpush.bf16.msra.mxu0 %v960
    %1406 = vmatpush.bf16.msra.mxu0 %v956
    %1407 = vmatpush.bf16.msra.mxu0 %v952
    %1408 = vmatmul.bf16.gmra.mxu0 %v88
    %v1409 = vpop.f32.mrf.mxu0
    %v1410 = vadd.f32 %v1397, %v1409
    %v1411 = vpop.f32.mrf.mxu0
    %1412 = vdwg.mxu0
    %1413 = vmatpush.bf16.msra.mxu0 %v1012
    %1414 = vmatpush.bf16.msra.mxu0 %v1008
    %1415 = vmatpush.bf16.msra.mxu0 %v1004
    %1416 = vmatpush.bf16.msra.mxu0 %v1000
    %1417 = vmatpush.bf16.msra.mxu0 %v996
    %1418 = vmatpush.bf16.msra.mxu0 %v992
    %1419 = vmatpush.bf16.msra.mxu0 %v988
    %1420 = vmatpush.bf16.msra.mxu0 %v984
    %1421 = vmatmul.bf16.gmra.mxu0 %v89
    %v1422 = vpop.f32.mrf.mxu0
    %v1423 = vadd.f32 %v1410, %v1422
    %v1424 = vpop.f32.mrf.mxu0
    %1425 = vdwg.mxu0
    %1426 = vmatpush.bf16.msra.mxu0 %v1044
    %1427 = vmatpush.bf16.msra.mxu0 %v1040
    %1428 = vmatpush.bf16.msra.mxu0 %v1036
    %1429 = vmatpush.bf16.msra.mxu0 %v1032
    %1430 = vmatpush.bf16.msra.mxu0 %v1028
    %1431 = vmatpush.bf16.msra.mxu0 %v1024
    %1432 = vmatpush.bf16.msra.mxu0 %v1020
    %1433 = vmatpush.bf16.msra.mxu0 %v1016
    %1434 = vmatmul.bf16.gmra.mxu0 %v90
    %v1435 = vpop.f32.mrf.mxu0
    %v1436 = vadd.f32 %v1423, %v1435
    %v1437 = vpop.f32.mrf.mxu0
    %1438 = vdwg.mxu0
    %1439 = vmatpush.bf16.msra.mxu0 %v1076
    %1440 = vmatpush.bf16.msra.mxu0 %v1072
    %1441 = vmatpush.bf16.msra.mxu0 %v1068
    %1442 = vmatpush.bf16.msra.mxu0 %v1064
    %1443 = vmatpush.bf16.msra.mxu0 %v1060
    %1444 = vmatpush.bf16.msra.mxu0 %v1056
    %1445 = vmatpush.bf16.msra.mxu0 %v1052
    %1446 = vmatpush.bf16.msra.mxu0 %v1048
    %1447 = vmatmul.bf16.gmra.mxu0 %v91
    %v1448 = vpop.f32.mrf.mxu0
    %v1449 = vadd.f32 %v1436, %v1448
    %v1450 = vpop.f32.mrf.mxu0
    %1451 = vdwg.mxu0
    %1452 = vmatpush.bf16.msra.mxu0 0
    %1453 = vmatpush.bf16.msra.mxu0 0
    %1454 = vmatpush.bf16.msra.mxu0 0
    %1455 = vmatpush.bf16.msra.mxu0 0
    %1456 = vmatpush.bf16.msra.mxu0 0
    %1457 = vmatpush.bf16.msra.mxu0 0
    %1458 = vmatpush.bf16.msra.mxu0 0
    %1459 = vmatpush.bf16.msra.mxu0 %v1080
    %1460 = vmatmul.bf16.gmra.mxu0 %v1281
    %v1461 = vpop.f32.mrf.mxu0
    %v1462 = vadd.f32 %v1449, %v1461
    %v1463 = vpop.f32.mrf.mxu0
    %1464 = vdwg.mxu0
    %1465 = vmatpush.bf16.msra.mxu0 %v917
    %1466 = vmatpush.bf16.msra.mxu0 %v913
    %1467 = vmatpush.bf16.msra.mxu0 %v909
    %1468 = vmatpush.bf16.msra.mxu0 %v905
    %1469 = vmatpush.bf16.msra.mxu0 %v901
    %1470 = vmatpush.bf16.msra.mxu0 %v897
    %1471 = vmatpush.bf16.msra.mxu0 %v893
    %1472 = vmatpush.bf16.msra.mxu0 %v889
    %1473 = vmatmul.bf16.gmra.mxu0 %v86
    %v1474 = vpop.f32.mrf.mxu0
    %v1475 = vadd.f32 %v293, %v1474
    %v1476 = vpop.f32.mrf.mxu0
    %1477 = vdwg.mxu0
    %1478 = vmatpush.bf16.msra.mxu0 %v949
    %1479 = vmatpush.bf16.msra.mxu0 %v945
    %1480 = vmatpush.bf16.msra.mxu0 %v941
    %1481 = vmatpush.bf16.msra.mxu0 %v937
    %1482 = vmatpush.bf16.msra.mxu0 %v933
    %1483 = vmatpush.bf16.msra.mxu0 %v929
    %1484 = vmatpush.bf16.msra.mxu0 %v925
    %1485 = vmatpush.bf16.msra.mxu0 %v921
    %1486 = vmatmul.bf16.gmra.mxu0 %v87
    %v1487 = vpop.f32.mrf.mxu0
    %v1488 = vadd.f32 %v1475, %v1487
    %v1489 = vpop.f32.mrf.mxu0
    %1490 = vdwg.mxu0
    %1491 = vmatpush.bf16.msra.mxu0 %v981
    %1492 = vmatpush.bf16.msra.mxu0 %v977
    %1493 = vmatpush.bf16.msra.mxu0 %v973
    %1494 = vmatpush.bf16.msra.mxu0 %v969
    %1495 = vmatpush.bf16.msra.mxu0 %v965
    %1496 = vmatpush.bf16.msra.mxu0 %v961
    %1497 = vmatpush.bf16.msra.mxu0 %v957
    %1498 = vmatpush.bf16.msra.mxu0 %v953
    %1499 = vmatmul.bf16.gmra.mxu0 %v88
    %v1500 = vpop.f32.mrf.mxu0
    %v1501 = vadd.f32 %v1488, %v1500
    %v1502 = vpop.f32.mrf.mxu0
    %1503 = vdwg.mxu0
    %1504 = vmatpush.bf16.msra.mxu0 %v1013
    %1505 = vmatpush.bf16.msra.mxu0 %v1009
    %1506 = vmatpush.bf16.msra.mxu0 %v1005
    %1507 = vmatpush.bf16.msra.mxu0 %v1001
    %1508 = vmatpush.bf16.msra.mxu0 %v997
    %1509 = vmatpush.bf16.msra.mxu0 %v993
    %1510 = vmatpush.bf16.msra.mxu0 %v989
    %1511 = vmatpush.bf16.msra.mxu0 %v985
    %1512 = vmatmul.bf16.gmra.mxu0 %v89
    %v1513 = vpop.f32.mrf.mxu0
    %v1514 = vadd.f32 %v1501, %v1513
    %v1515 = vpop.f32.mrf.mxu0
    %1516 = vdwg.mxu0
    %1517 = vmatpush.bf16.msra.mxu0 %v1045
    %1518 = vmatpush.bf16.msra.mxu0 %v1041
    %1519 = vmatpush.bf16.msra.mxu0 %v1037
    %1520 = vmatpush.bf16.msra.mxu0 %v1033
    %1521 = vmatpush.bf16.msra.mxu0 %v1029
    %1522 = vmatpush.bf16.msra.mxu0 %v1025
    %1523 = vmatpush.bf16.msra.mxu0 %v1021
    %1524 = vmatpush.bf16.msra.mxu0 %v1017
    %1525 = vmatmul.bf16.gmra.mxu0 %v90
    %v1526 = vpop.f32.mrf.mxu0
    %v1527 = vadd.f32 %v1514, %v1526
    %v1528 = vpop.f32.mrf.mxu0
    %1529 = vdwg.mxu0
    %1530 = vmatpush.bf16.msra.mxu0 %v1077
    %1531 = vmatpush.bf16.msra.mxu0 %v1073
    %1532 = vmatpush.bf16.msra.mxu0 %v1069
    %1533 = vmatpush.bf16.msra.mxu0 %v1065
    %1534 = vmatpush.bf16.msra.mxu0 %v1061
    %1535 = vmatpush.bf16.msra.mxu0 %v1057
    %1536 = vmatpush.bf16.msra.mxu0 %v1053
    %1537 = vmatpush.bf16.msra.mxu0 %v1049
    %1538 = vmatmul.bf16.gmra.mxu0 %v91
    %v1539 = vpop.f32.mrf.mxu0
    %v1540 = vadd.f32 %v1527, %v1539
    %v1541 = vpop.f32.mrf.mxu0
    %1542 = vdwg.mxu0
    %1543 = vmatpush.bf16.msra.mxu0 0
    %1544 = vmatpush.bf16.msra.mxu0 0
    %1545 = vmatpush.bf16.msra.mxu0 0
    %1546 = vmatpush.bf16.msra.mxu0 0
    %1547 = vmatpush.bf16.msra.mxu0 0
    %1548 = vmatpush.bf16.msra.mxu0 0
    %1549 = vmatpush.bf16.msra.mxu0 0
    %1550 = vmatpush.bf16.msra.mxu0 %v1081
    %1551 = vmatmul.bf16.gmra.mxu0 %v1281
    %v1552 = vpop.f32.mrf.mxu0
    %v1553 = vadd.f32 %v1540, %v1552
    %v1554 = vpop.f32.mrf.mxu0
    %1555 = vdwg.mxu0
    %1556 = vmatpush.bf16.msra.mxu0 %v918
    %1557 = vmatpush.bf16.msra.mxu0 %v914
    %1558 = vmatpush.bf16.msra.mxu0 %v910
    %1559 = vmatpush.bf16.msra.mxu0 %v906
    %1560 = vmatpush.bf16.msra.mxu0 %v902
    %1561 = vmatpush.bf16.msra.mxu0 %v898
    %1562 = vmatpush.bf16.msra.mxu0 %v894
    %1563 = vmatpush.bf16.msra.mxu0 %v890
    %1564 = vmatmul.bf16.gmra.mxu0 %v86
    %v1565 = vpop.f32.mrf.mxu0
    %v1566 = vadd.f32 %v294, %v1565
    %v1567 = vpop.f32.mrf.mxu0
    %1568 = vdwg.mxu0
    %1569 = vmatpush.bf16.msra.mxu0 %v950
    %1570 = vmatpush.bf16.msra.mxu0 %v946
    %1571 = vmatpush.bf16.msra.mxu0 %v942
    %1572 = vmatpush.bf16.msra.mxu0 %v938
    %1573 = vmatpush.bf16.msra.mxu0 %v934
    %1574 = vmatpush.bf16.msra.mxu0 %v930
    %1575 = vmatpush.bf16.msra.mxu0 %v926
    %1576 = vmatpush.bf16.msra.mxu0 %v922
    %1577 = vmatmul.bf16.gmra.mxu0 %v87
    %v1578 = vpop.f32.mrf.mxu0
    %v1579 = vadd.f32 %v1566, %v1578
    %v1580 = vpop.f32.mrf.mxu0
    %1581 = vdwg.mxu0
    %1582 = vmatpush.bf16.msra.mxu0 %v982
    %1583 = vmatpush.bf16.msra.mxu0 %v978
    %1584 = vmatpush.bf16.msra.mxu0 %v974
    %1585 = vmatpush.bf16.msra.mxu0 %v970
    %1586 = vmatpush.bf16.msra.mxu0 %v966
    %1587 = vmatpush.bf16.msra.mxu0 %v962
    %1588 = vmatpush.bf16.msra.mxu0 %v958
    %1589 = vmatpush.bf16.msra.mxu0 %v954
    %1590 = vmatmul.bf16.gmra.mxu0 %v88
    %v1591 = vpop.f32.mrf.mxu0
    %v1592 = vadd.f32 %v1579, %v1591
    %v1593 = vpop.f32.mrf.mxu0
    %1594 = vdwg.mxu0
    %1595 = vmatpush.bf16.msra.mxu0 %v1014
    %1596 = vmatpush.bf16.msra.mxu0 %v1010
    %1597 = vmatpush.bf16.msra.mxu0 %v1006
    %1598 = vmatpush.bf16.msra.mxu0 %v1002
    %1599 = vmatpush.bf16.msra.mxu0 %v998
    %1600 = vmatpush.bf16.msra.mxu0 %v994
    %1601 = vmatpush.bf16.msra.mxu0 %v990
    %1602 = vmatpush.bf16.msra.mxu0 %v986
    %1603 = vmatmul.bf16.gmra.mxu0 %v89
    %v1604 = vpop.f32.mrf.mxu0
    %v1605 = vadd.f32 %v1592, %v1604
    %v1606 = vpop.f32.mrf.mxu0
    %1607 = vdwg.mxu0
    %1608 = vmatpush.bf16.msra.mxu0 %v1046
    %1609 = vmatpush.bf16.msra.mxu0 %v1042
    %1610 = vmatpush.bf16.msra.mxu0 %v1038
    %1611 = vmatpush.bf16.msra.mxu0 %v1034
    %1612 = vmatpush.bf16.msra.mxu0 %v1030
    %1613 = vmatpush.bf16.msra.mxu0 %v1026
    %1614 = vmatpush.bf16.msra.mxu0 %v1022
    %1615 = vmatpush.bf16.msra.mxu0 %v1018
    %1616 = vmatmul.bf16.gmra.mxu0 %v90
    %v1617 = vpop.f32.mrf.mxu0
    %v1618 = vadd.f32 %v1605, %v1617
    %v1619 = vpop.f32.mrf.mxu0
    %1620 = vdwg.mxu0
    %1621 = vmatpush.bf16.msra.mxu0 %v1078
    %1622 = vmatpush.bf16.msra.mxu0 %v1074
    %1623 = vmatpush.bf16.msra.mxu0 %v1070
    %1624 = vmatpush.bf16.msra.mxu0 %v1066
    %1625 = vmatpush.bf16.msra.mxu0 %v1062
    %1626 = vmatpush.bf16.msra.mxu0 %v1058
    %1627 = vmatpush.bf16.msra.mxu0 %v1054
    %1628 = vmatpush.bf16.msra.mxu0 %v1050
    %1629 = vmatmul.bf16.gmra.mxu0 %v91
    %v1630 = vpop.f32.mrf.mxu0
    %v1631 = vadd.f32 %v1618, %v1630
    %v1632 = vpop.f32.mrf.mxu0
    %1633 = vdwg.mxu0
    %1634 = vmatpush.bf16.msra.mxu0 0
    %1635 = vmatpush.bf16.msra.mxu0 0
    %1636 = vmatpush.bf16.msra.mxu0 0
    %1637 = vmatpush.bf16.msra.mxu0 0
    %1638 = vmatpush.bf16.msra.mxu0 0
    %1639 = vmatpush.bf16.msra.mxu0 0
    %1640 = vmatpush.bf16.msra.mxu0 0
    %1641 = vmatpush.bf16.msra.mxu0 %v1082
    %1642 = vmatmul.bf16.gmra.mxu0 %v1281
    %v1643 = vpop.f32.mrf.mxu0
    %v1644 = vadd.f32 %v1631, %v1643
    %v1645 = vpop.f32.mrf.mxu0
    %1646 = vdwg.mxu0
    %v1647 = vmax.f32 %v1371, 0.0
    %v1648 = vmax.f32 %v1462, 0.0
    %v1649 = vmax.f32 %v1553, 0.0
    %v1650 = vmax.f32 %v1644, 0.0
    %v1651 = vpack.c.bf16 %v1647, %v1647
    %v1652 = vpack.c.bf16 %v1648, %v1648
    %v1653 = vpack.c.bf16 %v1649, %v1649
    %v1654 = vpack.c.bf16 %v1650, %v1650
    %v1655 = vld [vmem:[#allocation4] sm:$0xff]
    %v1656 = vld [vmem:[#allocation4 + $0x8] sm:$0xff]
    %v1657 = vld [vmem:[#allocation4 + $0x10] sm:$0xff]
    %v1658 = vld [vmem:[#allocation4 + $0x18] sm:$0xff]
    %v1659 = vld [vmem:[#allocation4 + $0x20] sm:$0xff]
    %v1660 = vld [vmem:[#allocation4 + $0x28] sm:$0xff]
    %v1661 = vld [vmem:[#allocation4 + $0x30] sm:$0xff]
    %v1662 = vld [vmem:[#allocation4 + $0x38] sm:$0xff]
    %v1663 = vld [vmem:[#allocation4 + $0x40] sm:$0xff]
    %v1664 = vld [vmem:[#allocation4 + $0x48] sm:$0xff]
    %v1665 = vld [vmem:[#allocation4 + $0x50] sm:$0xff]
    %v1666 = vld [vmem:[#allocation4 + $0x58] sm:$0xff]
    %v1667 = vld [vmem:[#allocation4 + $0x60] sm:$0xff]
    %v1668 = vld [vmem:[#allocation4 + $0x68] sm:$0xff]
    %v1669 = vld [vmem:[#allocation4 + $0x70] sm:$0xff]
    %v1670 = vld [vmem:[#allocation4 + $0x78] sm:$0xff]
    %v1671 = vld [vmem:[#allocation4 + $0x80] sm:$0xff]
    %v1672 = vld [vmem:[#allocation4 + $0x88] sm:$0xff]
    %v1673 = vld [vmem:[#allocation4 + $0x90] sm:$0xff]
    %v1674 = vld [vmem:[#allocation4 + $0x98] sm:$0xff]
    %v1675 = vld [vmem:[#allocation4 + $0xa0] sm:$0xff]
    %v1676 = vld [vmem:[#allocation4 + $0xa8] sm:$0xff]
    %v1677 = vld [vmem:[#allocation4 + $0xb0] sm:$0xff]
    %v1678 = vld [vmem:[#allocation4 + $0xb8] sm:$0xff]
    %v1679 = vld [vmem:[#allocation4 + $0xc0] sm:$0xff]
    %v1680 = vld [vmem:[#allocation4 + $0xc8] sm:$0xff]
    %v1681 = vld [vmem:[#allocation4 + $0xd0] sm:$0xff]
    %v1682 = vld [vmem:[#allocation4 + $0xd8] sm:$0xff]
    %v1683 = vld [vmem:[#allocation4 + $0xe0] sm:$0xff]
    %v1684 = vld [vmem:[#allocation4 + $0xe8] sm:$0xff]
    %v1685 = vld [vmem:[#allocation4 + $0xf0] sm:$0xff]
    %v1686 = vld [vmem:[#allocation4 + $0xf8] sm:$0xff]
    %v1687 = vld [vmem:[#allocation4 + $0x100] sm:$0xff]
    %v1688 = vld [vmem:[#allocation4 + $0x108] sm:$0xff]
    %v1689 = vld [vmem:[#allocation4 + $0x110] sm:$0xff]
    %v1690 = vld [vmem:[#allocation4 + $0x118] sm:$0xff]
    %v1691 = vld [vmem:[#allocation4 + $0x120] sm:$0xff]
    %v1692 = vld [vmem:[#allocation4 + $0x128] sm:$0xff]
    %v1693 = vld [vmem:[#allocation4 + $0x130] sm:$0xff]
    %v1694 = vld [vmem:[#allocation4 + $0x138] sm:$0xff]
    %v1695 = vld [vmem:[#allocation4 + $0x140] sm:$0xff]
    %v1696 = vld [vmem:[#allocation4 + $0x148] sm:$0xff]
    %v1697 = vld [vmem:[#allocation4 + $0x150] sm:$0xff]
    %v1698 = vld [vmem:[#allocation4 + $0x158] sm:$0xff]
    %v1699 = vld [vmem:[#allocation4 + $0x160] sm:$0xff]
    %v1700 = vld [vmem:[#allocation4 + $0x168] sm:$0xff]
    %v1701 = vld [vmem:[#allocation4 + $0x170] sm:$0xff]
    %v1702 = vld [vmem:[#allocation4 + $0x178] sm:$0xff]
    %v1703 = vld [vmem:[#allocation4 + $0x180] sm:$0xff]
    %v1704 = vld [vmem:[#allocation4 + $0x188] sm:$0xff]
    %v1705 = vld [vmem:[#allocation4 + $0x190] sm:$0xff]
    %v1706 = vld [vmem:[#allocation4 + $0x198] sm:$0xff]
    %v1707 = vld [vmem:[#allocation4 + $0x1a0] sm:$0xff]
    %v1708 = vld [vmem:[#allocation4 + $0x1a8] sm:$0xff]
    %v1709 = vld [vmem:[#allocation4 + $0x1b0] sm:$0xff]
    %v1710 = vld [vmem:[#allocation4 + $0x1b8] sm:$0xff]
    %v1711 = vld [vmem:[#allocation4 + $0x1c0] sm:$0xff]
    %v1712 = vld [vmem:[#allocation4 + $0x1c8] sm:$0xff]
    %v1713 = vld [vmem:[#allocation4 + $0x1d0] sm:$0xff]
    %v1714 = vld [vmem:[#allocation4 + $0x1d8] sm:$0xff]
    %v1715 = vld [vmem:[#allocation4 + $0x1e0] sm:$0xff]
    %v1716 = vld [vmem:[#allocation4 + $0x1e8] sm:$0xff]
    %v1717 = vld [vmem:[#allocation4 + $0x1f0] sm:$0xff]
    %v1718 = vld [vmem:[#allocation4 + $0x1f8] sm:$0xff]
    %v1719 = vld [vmem:[%s4] sm:$0x3]
    %v1721 = vperm.slane %v1719, 0
    %v1722 = vperm.slane %v1719, 1
    %v1789 = vunpack.c.l.b16 %v1655
    %v1790 = vunpack.c.h.b16 %v1655
    %v1791 = vunpack.c.l.b16 %v1656
    %v1792 = vunpack.c.h.b16 %v1656
    %v1793 = vunpack.c.l.b16 %v1657
    %v1794 = vunpack.c.h.b16 %v1657
    %v1795 = vunpack.c.l.b16 %v1658
    %v1796 = vunpack.c.h.b16 %v1658
    %v1797 = vunpack.c.l.b16 %v1659
    %v1798 = vunpack.c.h.b16 %v1659
    %v1799 = vunpack.c.l.b16 %v1660
    %v1800 = vunpack.c.h.b16 %v1660
    %v1801 = vunpack.c.l.b16 %v1661
    %v1802 = vunpack.c.h.b16 %v1661
    %v1803 = vunpack.c.l.b16 %v1662
    %v1804 = vunpack.c.h.b16 %v1662
    %v1805 = vunpack.c.l.b16 %v1663
    %v1806 = vunpack.c.h.b16 %v1663
    %v1807 = vunpack.c.l.b16 %v1664
    %v1808 = vunpack.c.h.b16 %v1664
    %v1809 = vunpack.c.l.b16 %v1665
    %v1810 = vunpack.c.h.b16 %v1665
    %v1811 = vunpack.c.l.b16 %v1666
    %v1812 = vunpack.c.h.b16 %v1666
    %v1813 = vunpack.c.l.b16 %v1667
    %v1814 = vunpack.c.h.b16 %v1667
    %v1815 = vunpack.c.l.b16 %v1668
    %v1816 = vunpack.c.h.b16 %v1668
    %v1817 = vunpack.c.l.b16 %v1669
    %v1818 = vunpack.c.h.b16 %v1669
    %v1819 = vunpack.c.l.b16 %v1670
    %v1820 = vunpack.c.h.b16 %v1670
    %v1821 = vunpack.c.l.b16 %v1671
    %v1822 = vunpack.c.h.b16 %v1671
    %v1823 = vunpack.c.l.b16 %v1672
    %v1824 = vunpack.c.h.b16 %v1672
    %v1825 = vunpack.c.l.b16 %v1673
    %v1826 = vunpack.c.h.b16 %v1673
    %v1827 = vunpack.c.l.b16 %v1674
    %v1828 = vunpack.c.h.b16 %v1674
    %v1829 = vunpack.c.l.b16 %v1675
    %v1830 = vunpack.c.h.b16 %v1675
    %v1831 = vunpack.c.l.b16 %v1676
    %v1832 = vunpack.c.h.b16 %v1676
    %v1833 = vunpack.c.l.b16 %v1677
    %v1834 = vunpack.c.h.b16 %v1677
    %v1835 = vunpack.c.l.b16 %v1678
    %v1836 = vunpack.c.h.b16 %v1678
    %v1837 = vunpack.c.l.b16 %v1679
    %v1838 = vunpack.c.h.b16 %v1679
    %v1839 = vunpack.c.l.b16 %v1680
    %v1840 = vunpack.c.h.b16 %v1680
    %v1841 = vunpack.c.l.b16 %v1681
    %v1842 = vunpack.c.h.b16 %v1681
    %v1843 = vunpack.c.l.b16 %v1682
    %v1844 = vunpack.c.h.b16 %v1682
    %v1845 = vunpack.c.l.b16 %v1683
    %v1846 = vunpack.c.h.b16 %v1683
    %v1847 = vunpack.c.l.b16 %v1684
    %v1848 = vunpack.c.h.b16 %v1684
    %v1849 = vunpack.c.l.b16 %v1685
    %v1850 = vunpack.c.h.b16 %v1685
    %v1851 = vunpack.c.l.b16 %v1686
    %v1852 = vunpack.c.h.b16 %v1686
    %v1853 = vunpack.c.l.b16 %v1687
    %v1854 = vunpack.c.h.b16 %v1687
    %v1855 = vunpack.c.l.b16 %v1688
    %v1856 = vunpack.c.h.b16 %v1688
    %v1857 = vunpack.c.l.b16 %v1689
    %v1858 = vunpack.c.h.b16 %v1689
    %v1859 = vunpack.c.l.b16 %v1690
    %v1860 = vunpack.c.h.b16 %v1690
    %v1861 = vunpack.c.l.b16 %v1691
    %v1862 = vunpack.c.h.b16 %v1691
    %v1863 = vunpack.c.l.b16 %v1692
    %v1864 = vunpack.c.h.b16 %v1692
    %v1865 = vunpack.c.l.b16 %v1693
    %v1866 = vunpack.c.h.b16 %v1693
    %v1867 = vunpack.c.l.b16 %v1694
    %v1868 = vunpack.c.h.b16 %v1694
    %v1869 = vunpack.c.l.b16 %v1695
    %v1870 = vunpack.c.h.b16 %v1695
    %v1871 = vunpack.c.l.b16 %v1696
    %v1872 = vunpack.c.h.b16 %v1696
    %v1873 = vunpack.c.l.b16 %v1697
    %v1874 = vunpack.c.h.b16 %v1697
    %v1875 = vunpack.c.l.b16 %v1698
    %v1876 = vunpack.c.h.b16 %v1698
    %v1877 = vunpack.c.l.b16 %v1699
    %v1878 = vunpack.c.h.b16 %v1699
    %v1879 = vunpack.c.l.b16 %v1700
    %v1880 = vunpack.c.h.b16 %v1700
    %v1881 = vunpack.c.l.b16 %v1701
    %v1882 = vunpack.c.h.b16 %v1701
    %v1883 = vunpack.c.l.b16 %v1702
    %v1884 = vunpack.c.h.b16 %v1702
    %v1885 = vunpack.c.l.b16 %v1703
    %v1886 = vunpack.c.h.b16 %v1703
    %v1887 = vunpack.c.l.b16 %v1704
    %v1888 = vunpack.c.h.b16 %v1704
    %v1889 = vunpack.c.l.b16 %v1705
    %v1890 = vunpack.c.h.b16 %v1705
    %v1891 = vunpack.c.l.b16 %v1706
    %v1892 = vunpack.c.h.b16 %v1706
    %v1893 = vunpack.c.l.b16 %v1707
    %v1894 = vunpack.c.h.b16 %v1707
    %v1895 = vunpack.c.l.b16 %v1708
    %v1896 = vunpack.c.h.b16 %v1708
    %v1897 = vunpack.c.l.b16 %v1709
    %v1898 = vunpack.c.h.b16 %v1709
    %v1899 = vunpack.c.l.b16 %v1710
    %v1900 = vunpack.c.h.b16 %v1710
    %v1901 = vunpack.c.l.b16 %v1711
    %v1902 = vunpack.c.h.b16 %v1711
    %v1903 = vunpack.c.l.b16 %v1712
    %v1904 = vunpack.c.h.b16 %v1712
    %v1905 = vunpack.c.l.b16 %v1713
    %v1906 = vunpack.c.h.b16 %v1713
    %v1907 = vunpack.c.l.b16 %v1714
    %v1908 = vunpack.c.h.b16 %v1714
    %v1909 = vunpack.c.l.b16 %v1715
    %v1910 = vunpack.c.h.b16 %v1715
    %v1911 = vunpack.c.l.b16 %v1716
    %v1912 = vunpack.c.h.b16 %v1716
    %v1913 = vunpack.c.l.b16 %v1717
    %v1914 = vunpack.c.h.b16 %v1717
    %v1915 = vunpack.c.l.b16 %v1718
    %v1916 = vunpack.c.h.b16 %v1718
    %v1917 = vpack.c.b16 %v1791, %v1789
    %v1918 = vpack.c.b16 %v1792, %v1790
    %v1919 = vpack.c.b16 %v1795, %v1793
    %v1920 = vpack.c.b16 %v1796, %v1794
    %v1921 = vpack.c.b16 %v1799, %v1797
    %v1922 = vpack.c.b16 %v1800, %v1798
    %v1923 = vpack.c.b16 %v1803, %v1801
    %v1924 = vpack.c.b16 %v1804, %v1802
    %v1925 = vpack.c.b16 %v1807, %v1805
    %v1926 = vpack.c.b16 %v1808, %v1806
    %v1927 = vpack.c.b16 %v1811, %v1809
    %v1928 = vpack.c.b16 %v1812, %v1810
    %v1929 = vpack.c.b16 %v1815, %v1813
    %v1930 = vpack.c.b16 %v1816, %v1814
    %v1931 = vpack.c.b16 %v1819, %v1817
    %v1932 = vpack.c.b16 %v1820, %v1818
    %v1933 = vpack.c.b16 %v1823, %v1821
    %v1934 = vpack.c.b16 %v1824, %v1822
    %v1935 = vpack.c.b16 %v1827, %v1825
    %v1936 = vpack.c.b16 %v1828, %v1826
    %v1937 = vpack.c.b16 %v1831, %v1829
    %v1938 = vpack.c.b16 %v1832, %v1830
    %v1939 = vpack.c.b16 %v1835, %v1833
    %v1940 = vpack.c.b16 %v1836, %v1834
    %v1941 = vpack.c.b16 %v1839, %v1837
    %v1942 = vpack.c.b16 %v1840, %v1838
    %v1943 = vpack.c.b16 %v1843, %v1841
    %v1944 = vpack.c.b16 %v1844, %v1842
    %v1945 = vpack.c.b16 %v1847, %v1845
    %v1946 = vpack.c.b16 %v1848, %v1846
    %v1947 = vpack.c.b16 %v1851, %v1849
    %v1948 = vpack.c.b16 %v1852, %v1850
    %v1949 = vpack.c.b16 %v1855, %v1853
    %v1950 = vpack.c.b16 %v1856, %v1854
    %v1951 = vpack.c.b16 %v1859, %v1857
    %v1952 = vpack.c.b16 %v1860, %v1858
    %v1953 = vpack.c.b16 %v1863, %v1861
    %v1954 = vpack.c.b16 %v1864, %v1862
    %v1955 = vpack.c.b16 %v1867, %v1865
    %v1956 = vpack.c.b16 %v1868, %v1866
    %v1957 = vpack.c.b16 %v1871, %v1869
    %v1958 = vpack.c.b16 %v1872, %v1870
    %v1959 = vpack.c.b16 %v1875, %v1873
    %v1960 = vpack.c.b16 %v1876, %v1874
    %v1961 = vpack.c.b16 %v1879, %v1877
    %v1962 = vpack.c.b16 %v1880, %v1878
    %v1963 = vpack.c.b16 %v1883, %v1881
    %v1964 = vpack.c.b16 %v1884, %v1882
    %v1965 = vpack.c.b16 %v1887, %v1885
    %v1966 = vpack.c.b16 %v1888, %v1886
    %v1967 = vpack.c.b16 %v1891, %v1889
    %v1968 = vpack.c.b16 %v1892, %v1890
    %v1969 = vpack.c.b16 %v1895, %v1893
    %v1970 = vpack.c.b16 %v1896, %v1894
    %v1971 = vpack.c.b16 %v1899, %v1897
    %v1972 = vpack.c.b16 %v1900, %v1898
    %v1973 = vpack.c.b16 %v1903, %v1901
    %v1974 = vpack.c.b16 %v1904, %v1902
    %v1975 = vpack.c.b16 %v1907, %v1905
    %v1976 = vpack.c.b16 %v1908, %v1906
    %v1977 = vpack.c.b16 %v1911, %v1909
    %v1978 = vpack.c.b16 %v1912, %v1910
    %v1979 = vpack.c.b16 %v1915, %v1913
    %v1980 = vpack.c.b16 %v1916, %v1914
    %2045 = vmatpush.bf16.msra.mxu0 %v1931
    %2046 = vmatpush.bf16.msra.mxu0 %v1929
    %2047 = vmatpush.bf16.msra.mxu0 %v1927
    %2048 = vmatpush.bf16.msra.mxu0 %v1925
    %2049 = vmatpush.bf16.msra.mxu0 %v1923
    %2050 = vmatpush.bf16.msra.mxu0 %v1921
    %2051 = vmatpush.bf16.msra.mxu0 %v1919
    %2052 = vmatpush.bf16.msra.mxu0 %v1917
    %2053 = vmatmul.bf16.gmra.mxu0 %v1651
    %v2054 = vpop.f32.mrf.mxu0
    %v2055 = vadd.f32 %v1721, %v2054
    %v2056 = vpop.f32.mrf.mxu0
    %2057 = vdwg.mxu0
    %2058 = vmatpush.bf16.msra.mxu0 %v1947
    %2059 = vmatpush.bf16.msra.mxu0 %v1945
    %2060 = vmatpush.bf16.msra.mxu0 %v1943
    %2061 = vmatpush.bf16.msra.mxu0 %v1941
    %2062 = vmatpush.bf16.msra.mxu0 %v1939
    %2063 = vmatpush.bf16.msra.mxu0 %v1937
    %2064 = vmatpush.bf16.msra.mxu0 %v1935
    %2065 = vmatpush.bf16.msra.mxu0 %v1933
    %2066 = vmatmul.bf16.gmra.mxu0 %v1652
    %v2067 = vpop.f32.mrf.mxu0
    %v2068 = vadd.f32 %v2055, %v2067
    %v2069 = vpop.f32.mrf.mxu0
    %2070 = vdwg.mxu0
    %2071 = vmatpush.bf16.msra.mxu0 %v1963
    %2072 = vmatpush.bf16.msra.mxu0 %v1961
    %2073 = vmatpush.bf16.msra.mxu0 %v1959
    %2074 = vmatpush.bf16.msra.mxu0 %v1957
    %2075 = vmatpush.bf16.msra.mxu0 %v1955
    %2076 = vmatpush.bf16.msra.mxu0 %v1953
    %2077 = vmatpush.bf16.msra.mxu0 %v1951
    %2078 = vmatpush.bf16.msra.mxu0 %v1949
    %2079 = vmatmul.bf16.gmra.mxu0 %v1653
    %v2080 = vpop.f32.mrf.mxu0
    %v2081 = vadd.f32 %v2068, %v2080
    %v2082 = vpop.f32.mrf.mxu0
    %2083 = vdwg.mxu0
    %2084 = vmatpush.bf16.msra.mxu0 %v1979
    %2085 = vmatpush.bf16.msra.mxu0 %v1977
    %2086 = vmatpush.bf16.msra.mxu0 %v1975
    %2087 = vmatpush.bf16.msra.mxu0 %v1973
    %2088 = vmatpush.bf16.msra.mxu0 %v1971
    %2089 = vmatpush.bf16.msra.mxu0 %v1969
    %2090 = vmatpush.bf16.msra.mxu0 %v1967
    %2091 = vmatpush.bf16.msra.mxu0 %v1965
    %2092 = vmatmul.bf16.gmra.mxu0 %v1654
    %v2093 = vpop.f32.mrf.mxu0
    %v2094 = vadd.f32 %v2081, %v2093
    %v2095 = vpop.f32.mrf.mxu0
    %2096 = vdwg.mxu0
    %2097 = vmatpush.bf16.msra.mxu0 %v1932
    %2098 = vmatpush.bf16.msra.mxu0 %v1930
    %2099 = vmatpush.bf16.msra.mxu0 %v1928
    %2100 = vmatpush.bf16.msra.mxu0 %v1926
    %2101 = vmatpush.bf16.msra.mxu0 %v1924
    %2102 = vmatpush.bf16.msra.mxu0 %v1922
    %2103 = vmatpush.bf16.msra.mxu0 %v1920
    %2104 = vmatpush.bf16.msra.mxu0 %v1918
    %2105 = vmatmul.bf16.gmra.mxu0 %v1651
    %v2106 = vpop.f32.mrf.mxu0
    %v2107 = vadd.f32 %v1722, %v2106
    %v2108 = vpop.f32.mrf.mxu0
    %2109 = vdwg.mxu0
    %2110 = vmatpush.bf16.msra.mxu0 %v1948
    %2111 = vmatpush.bf16.msra.mxu0 %v1946
    %2112 = vmatpush.bf16.msra.mxu0 %v1944
    %2113 = vmatpush.bf16.msra.mxu0 %v1942
    %2114 = vmatpush.bf16.msra.mxu0 %v1940
    %2115 = vmatpush.bf16.msra.mxu0 %v1938
    %2116 = vmatpush.bf16.msra.mxu0 %v1936
    %2117 = vmatpush.bf16.msra.mxu0 %v1934
    %2118 = vmatmul.bf16.gmra.mxu0 %v1652
    %v2119 = vpop.f32.mrf.mxu0
    %v2120 = vadd.f32 %v2107, %v2119
    %v2121 = vpop.f32.mrf.mxu0
    %2122 = vdwg.mxu0
    %2123 = vmatpush.bf16.msra.mxu0 %v1964
    %2124 = vmatpush.bf16.msra.mxu0 %v1962
    %2125 = vmatpush.bf16.msra.mxu0 %v1960
    %2126 = vmatpush.bf16.msra.mxu0 %v1958
    %2127 = vmatpush.bf16.msra.mxu0 %v1956
    %2128 = vmatpush.bf16.msra.mxu0 %v1954
    %2129 = vmatpush.bf16.msra.mxu0 %v1952
    %2130 = vmatpush.bf16.msra.mxu0 %v1950
    %2131 = vmatmul.bf16.gmra.mxu0 %v1653
    %v2132 = vpop.f32.mrf.mxu0
    %v2133 = vadd.f32 %v2120, %v2132
    %v2134 = vpop.f32.mrf.mxu0
    %2135 = vdwg.mxu0
    %2136 = vmatpush.bf16.msra.mxu0 %v1980
    %2137 = vmatpush.bf16.msra.mxu0 %v1978
    %2138 = vmatpush.bf16.msra.mxu0 %v1976
    %2139 = vmatpush.bf16.msra.mxu0 %v1974
    %2140 = vmatpush.bf16.msra.mxu0 %v1972
    %2141 = vmatpush.bf16.msra.mxu0 %v1970
    %2142 = vmatpush.bf16.msra.mxu0 %v1968
    %2143 = vmatpush.bf16.msra.mxu0 %v1966
    %2144 = vmatmul.bf16.gmra.mxu0 %v1654
    %v2145 = vpop.f32.mrf.mxu0
    %v2146 = vadd.f32 %v2133, %v2145
    %v2147 = vpop.f32.mrf.mxu0
    %2148 = vdwg.mxu0
    %v2149 = vmax.f32 %v2094, 0.0
    %v2150 = vmax.f32 %v2146, 0.0
    %v2151 = vpack.c.bf16 %v2149, %v2149
    %v2152 = vpack.c.bf16 %v2150, %v2150
    %v2153 = vld [vmem:[%s5] sm:$0xf]
    %v2154 = vld [vmem:[%s5 + $0x4] sm:$0xf]
    %v2155 = vld [vmem:[%s5 + $0x8] sm:$0xf]
    %v2156 = vld [vmem:[%s5 + $0xc] sm:$0xf]
    %v2157 = vld [vmem:[%s5 + $0x10] sm:$0xf]
    %v2158 = vld [vmem:[%s5 + $0x14] sm:$0xf]
    %v2159 = vld [vmem:[%s5 + $0x18] sm:$0xf]
    %v2160 = vld [vmem:[%s5 + $0x1c] sm:$0xf]
    %v2161 = vld [vmem:[%s5 + $0x20] sm:$0xf]
    %v2162 = vld [vmem:[%s5 + $0x24] sm:$0xf]
    %v2163 = vld [vmem:[%s5 + $0x28] sm:$0xf]
    %v2164 = vld [vmem:[%s5 + $0x2c] sm:$0xf]
    %v2165 = vld [vmem:[%s5 + $0x30] sm:$0xf]
    %v2166 = vld [vmem:[%s5 + $0x34] sm:$0xf]
    %v2167 = vld [vmem:[%s5 + $0x38] sm:$0xf]
    %v2168 = vld [vmem:[%s5 + $0x3c] sm:$0xf]
    %v2169 = vld [vmem:[%s5 + $0x40] sm:$0xf]
    %v2170 = vld [vmem:[%s5 + $0x44] sm:$0xf]
    %v2171 = vld [vmem:[%s5 + $0x48] sm:$0xf]
    %v2172 = vld [vmem:[%s5 + $0x4c] sm:$0xf]
    %v2173 = vld [vmem:[%s5 + $0x50] sm:$0xf]
    %v2174 = vld [vmem:[%s5 + $0x54] sm:$0xf]
    %v2175 = vld [vmem:[%s5 + $0x58] sm:$0xf]
    %v2176 = vld [vmem:[%s5 + $0x5c] sm:$0xf]
    %v2177 = vld [vmem:[%s5 + $0x60] sm:$0xf]
    %v2178 = vld [vmem:[%s5 + $0x64] sm:$0xf]
    %v2179 = vld [vmem:[%s5 + $0x68] sm:$0xf]
    %v2180 = vld [vmem:[%s5 + $0x6c] sm:$0xf]
    %v2181 = vld [vmem:[%s5 + $0x70] sm:$0xf]
    %v2182 = vld [vmem:[%s5 + $0x74] sm:$0xf]
    %v2183 = vld [vmem:[%s5 + $0x78] sm:$0xf]
    %v2184 = vld [vmem:[%s5 + $0x7c] sm:$0xf]
    %v2185 = vld [vmem:[%s6] sm:$0x1]
    %v2187 = vperm.slane %v2185, 0
    %v2221 = vunpack.c.l.b16 %v2153
    %v2222 = vunpack.c.l.b16 %v2154
    %v2223 = vunpack.c.l.b16 %v2155
    %v2224 = vunpack.c.l.b16 %v2156
    %v2225 = vunpack.c.l.b16 %v2157
    %v2226 = vunpack.c.l.b16 %v2158
    %v2227 = vunpack.c.l.b16 %v2159
    %v2228 = vunpack.c.l.b16 %v2160
    %v2229 = vunpack.c.l.b16 %v2161
    %v2230 = vunpack.c.l.b16 %v2162
    %v2231 = vunpack.c.l.b16 %v2163
    %v2232 = vunpack.c.l.b16 %v2164
    %v2233 = vunpack.c.l.b16 %v2165
    %v2234 = vunpack.c.l.b16 %v2166
    %v2235 = vunpack.c.l.b16 %v2167
    %v2236 = vunpack.c.l.b16 %v2168
    %v2237 = vunpack.c.l.b16 %v2169
    %v2238 = vunpack.c.l.b16 %v2170
    %v2239 = vunpack.c.l.b16 %v2171
    %v2240 = vunpack.c.l.b16 %v2172
    %v2241 = vunpack.c.l.b16 %v2173
    %v2242 = vunpack.c.l.b16 %v2174
    %v2243 = vunpack.c.l.b16 %v2175
    %v2244 = vunpack.c.l.b16 %v2176
    %v2245 = vunpack.c.l.b16 %v2177
    %v2246 = vunpack.c.l.b16 %v2178
    %v2247 = vunpack.c.l.b16 %v2179
    %v2248 = vunpack.c.l.b16 %v2180
    %v2249 = vunpack.c.l.b16 %v2181
    %v2250 = vunpack.c.l.b16 %v2182
    %v2251 = vunpack.c.l.b16 %v2183
    %v2252 = vunpack.c.l.b16 %v2184
    %v2253 = vpack.c.b16 %v2222, %v2221
    %v2254 = vpack.c.b16 %v2224, %v2223
    %v2255 = vpack.c.b16 %v2226, %v2225
    %v2256 = vpack.c.b16 %v2228, %v2227
    %v2257 = vpack.c.b16 %v2230, %v2229
    %v2258 = vpack.c.b16 %v2232, %v2231
    %v2259 = vpack.c.b16 %v2234, %v2233
    %v2260 = vpack.c.b16 %v2236, %v2235
    %v2261 = vpack.c.b16 %v2238, %v2237
    %v2262 = vpack.c.b16 %v2240, %v2239
    %v2263 = vpack.c.b16 %v2242, %v2241
    %v2264 = vpack.c.b16 %v2244, %v2243
    %v2265 = vpack.c.b16 %v2246, %v2245
    %v2266 = vpack.c.b16 %v2248, %v2247
    %v2267 = vpack.c.b16 %v2250, %v2249
    %v2268 = vpack.c.b16 %v2252, %v2251
    %2285 = vmatpush.bf16.msra.mxu0 %v2260
    %2286 = vmatpush.bf16.msra.mxu0 %v2259
    %2287 = vmatpush.bf16.msra.mxu0 %v2258
    %2288 = vmatpush.bf16.msra.mxu0 %v2257
    %2289 = vmatpush.bf16.msra.mxu0 %v2256
    %2290 = vmatpush.bf16.msra.mxu0 %v2255
    %2291 = vmatpush.bf16.msra.mxu0 %v2254
    %2292 = vmatpush.bf16.msra.mxu0 %v2253
    %2293 = vmatmul.bf16.gmra.mxu0 %v2151
    %v2294 = vpop.f32.mrf.mxu0
    %v2295 = vadd.f32 %v2187, %v2294
    %v2296 = vpop.f32.mrf.mxu0
    %2297 = vdwg.mxu0
    %2298 = vmatpush.bf16.msra.mxu0 %v2268
    %2299 = vmatpush.bf16.msra.mxu0 %v2267
    %2300 = vmatpush.bf16.msra.mxu0 %v2266
    %2301 = vmatpush.bf16.msra.mxu0 %v2265
    %2302 = vmatpush.bf16.msra.mxu0 %v2264
    %2303 = vmatpush.bf16.msra.mxu0 %v2263
    %2304 = vmatpush.bf16.msra.mxu0 %v2262
    %2305 = vmatpush.bf16.msra.mxu0 %v2261
    %2306 = vmatmul.bf16.gmra.mxu0 %v2152
    %v2307 = vpop.f32.mrf.mxu0
    %v2308 = vadd.f32 %v2295, %v2307
    %v2309 = vpop.f32.mrf.mxu0
    %2310 = vdwg.mxu0
    %v2311 = vmax.f32 %v2308, 0.0
    %v2312 = vpack.c.bf16 %v2311, %v2311
    %v2313 = vld [vmem:[%s7] sm:$0xf]
    %v2314 = vld [vmem:[%s7 + $0x4] sm:$0xf]
    %v2315 = vld [vmem:[%s7 + $0x8] sm:$0xf]
    %v2316 = vld [vmem:[%s7 + $0xc] sm:$0xf]
    %v2317 = vld [vmem:[%s7 + $0x10] sm:$0xf]
    %v2318 = vld [vmem:[%s7 + $0x14] sm:$0xf]
    %v2319 = vld [vmem:[%s7 + $0x18] sm:$0xf]
    %v2320 = vld [vmem:[%s7 + $0x1c] sm:$0xf]
    %v2321 = vld [vmem:[%s7 + $0x20] sm:$0xf]
    %v2322 = vld [vmem:[%s7 + $0x24] sm:$0xf]
    %v2323 = vld [vmem:[%s7 + $0x28] sm:$0xf]
    %v2324 = vld [vmem:[%s7 + $0x2c] sm:$0xf]
    %v2325 = vld [vmem:[%s7 + $0x30] sm:$0xf]
    %v2326 = vld [vmem:[%s7 + $0x34] sm:$0xf]
    %v2327 = vld [vmem:[%s7 + $0x38] sm:$0xf]
    %v2328 = vld [vmem:[%s7 + $0x3c] sm:$0xf]
    %v2329 = vld [vmem:[%s8] sm:$0x1]
    %v2331 = vperm.slane %v2329, 0
    %v2349 = vunpack.c.l.b16 %v2313
    %v2350 = vunpack.c.l.b16 %v2314
    %v2351 = vunpack.c.l.b16 %v2315
    %v2352 = vunpack.c.l.b16 %v2316
    %v2353 = vunpack.c.l.b16 %v2317
    %v2354 = vunpack.c.l.b16 %v2318
    %v2355 = vunpack.c.l.b16 %v2319
    %v2356 = vunpack.c.l.b16 %v2320
    %v2357 = vunpack.c.l.b16 %v2321
    %v2358 = vunpack.c.l.b16 %v2322
    %v2359 = vunpack.c.l.b16 %v2323
    %v2360 = vunpack.c.l.b16 %v2324
    %v2361 = vunpack.c.l.b16 %v2325
    %v2362 = vunpack.c.l.b16 %v2326
    %v2363 = vunpack.c.l.b16 %v2327
    %v2364 = vunpack.c.l.b16 %v2328
    %v2365 = vpack.c.b16 %v2350, %v2349
    %v2366 = vpack.c.b16 %v2352, %v2351
    %v2367 = vpack.c.b16 %v2354, %v2353
    %v2368 = vpack.c.b16 %v2356, %v2355
    %v2369 = vpack.c.b16 %v2358, %v2357
    %v2370 = vpack.c.b16 %v2360, %v2359
    %v2371 = vpack.c.b16 %v2362, %v2361
    %v2372 = vpack.c.b16 %v2364, %v2363
    %2381 = vmatpush.bf16.msra.mxu0 %v2372
    %2382 = vmatpush.bf16.msra.mxu0 %v2371
    %2383 = vmatpush.bf16.msra.mxu0 %v2370
    %2384 = vmatpush.bf16.msra.mxu0 %v2369
    %2385 = vmatpush.bf16.msra.mxu0 %v2368
    %2386 = vmatpush.bf16.msra.mxu0 %v2367
    %2387 = vmatpush.bf16.msra.mxu0 %v2366
    %2388 = vmatpush.bf16.msra.mxu0 %v2365
    %2389 = vmatmul.bf16.gmra.mxu0 %v2312
    %v2390 = vpop.f32.mrf.mxu0
    %v2391 = vadd.f32 %v2331, %v2390
    %v2392 = vpop.f32.mrf.mxu0
    %2393 = vdwg.mxu0
    %v2394 = vpack.c.bf16 %v2391, %v2391
    %2395 = vst [vmem:[%s9] sm:$0x1] %v2394
    // Predicated region
    $region46: #{digit_classifier_forward.1} parent=1 // pred_check
      _
    $region47: #{digit_classifier_forward.1} parent=1 // pred_check_branch
      %2397 = sbr.rel (0) target = $region49
    $region48: #{digit_classifier_forward.1} parent=1 // pred_region
      _
    $region49: #{digit_classifier_forward.1} parent=1 // pred_fallthru
      _
    // Predicated region
    $region50: #{digit_classifier_forward.1} parent=1 // pred_check
      _
    $region51: #{digit_classifier_forward.1} parent=1 // pred_check_branch
      %2399 = sbr.rel (0) target = $region53
    $region52: #{digit_classifier_forward.1} parent=1 // pred_region
      _
    $region53: #{digit_classifier_forward.1} parent=1 // pred_fallthru
      _
    %2400 = vsyncpa [#allocation3], 1
    %2401 = vsyncpa [#allocation5], 1

</llo_original>
